<compile_context>
chip_gen: v7x
topology: tpu7x:2x2x1
jax: 0.10.0
libtpu: 0.0.40
codegen_flags: <defaults>
</compile_context>

<pallas_src>
import functools
import numpy as np
import jax
import jax.numpy as jnp
from jax.experimental import pallas as pl
from jax.experimental.pallas import tpu as pltpu

# ---- small synthetic NPC config (real NPC: feat=80, hidden=512, 4 blocks, k=15, mask=5)
FEAT_DIM    = 16    # input_size ("mel" dim)
HIDDEN      = 32    # hidden_size == upstream output_dim
N_BLOCKS    = 2     # n_blocks
KERNEL_SIZE = 9     # masked-conv kernel size (odd)
MASK_SIZE   = 3     # base mask size (odd); grows by +2 per layer
HOP         = 160   # downsample rate
WIN         = 400   # analysis window (samples)
BN_EPS      = 1e-5
CPAD        = 128   # channel dims padded to one full lane width (lane-dense)


def mask_conv_taps(i):
    """Tap indices of masked-conv layer i that are NOT zeroed out (static)."""
    cur_mask = MASK_SIZE + 2 * (i + 1)
    head = (KERNEL_SIZE - cur_mask) // 2
    return [k for k in range(KERNEL_SIZE) if not (head <= k < head + cur_mask)]


# ----------------------------------------------------------------------------
# Deterministic synthetic parameters, BN-folded / channel-padded / fused into
# two blobs, laid out in exact kernel consumption order.  Weight blob is a
# single row-stacked (T*CPAD, CPAD) bf16 slab so each conv layer's taps can be
# consumed with one static row-slice and one MXU matmul.
# ----------------------------------------------------------------------------
def init_params(key):
    kit = iter(jax.random.split(key, 256))

    def uni(shape, fan_in):
        b = 1.0 / np.sqrt(fan_in)
        return jax.random.uniform(next(kit), shape, jnp.float32, -b, b)

    def bn_scale_shift(h):
        gamma = 1.0 + 0.1 * jax.random.normal(next(kit), (1, h), jnp.float32)
        beta  = 0.1 * jax.random.normal(next(kit), (1, h), jnp.float32)
        mean  = 0.1 * jax.random.normal(next(kit), (1, h), jnp.float32)
        var   = 1.0 + 0.1 * jnp.abs(jax.random.normal(next(kit), (1, h), jnp.float32))
        scale = gamma / jnp.sqrt(var + BN_EPS)
        shift = beta - mean * scale
        return scale, shift

    def pad_w(w):   # (Cin, Cout) -> (CPAD, CPAD), zero fill
        return jnp.pad(w, ((0, CPAD - w.shape[0]), (0, CPAD - w.shape[1])))

    def pad_b(b):   # (1, Cout) -> (1, CPAD)
        return jnp.pad(b, ((0, 0), (0, CPAD - b.shape[1])))

    w_taps, biases = [], []
    for i in range(N_BLOCKS):
        cin = FEAT_DIM if i == 0 else HIDDEN

        # ConvBlock conv1(k=3) + BN1 (eval-mode folding is exact) -----------------
        c1_w = uni((3, cin, HIDDEN), 3 * cin)
        c1_b = uni((1, HIDDEN), 3 * cin)
        s1, t1 = bn_scale_shift(HIDDEN)
        w_taps += [pad_w(c1_w[k] * s1) for k in range(3)]
        biases.append(pad_b(c1_b * s1 + t1))

        # conv2(k=3) + BN2 --------------------------------------------------------
        c2_w = uni((3, HIDDEN, HIDDEN), 3 * HIDDEN)
        c2_b = uni((1, HIDDEN), 3 * HIDDEN)
        s2, t2 = bn_scale_shift(HIDDEN)
        w_taps += [pad_w(c2_w[k] * s2) for k in range(3)]
        biases.append(pad_b(c2_b * s2 + t2))

        # residual 1x1 conv (only when input_size != hidden_size, i.e. block 0) ---
        if i == 0:
            r_w = uni((cin, HIDDEN), cin)
            r_b = uni((1, HIDDEN), cin)
            w_taps.append(pad_w(r_w))
            biases.append(pad_b(r_b))

        # MaskConvBlock: conv(K) with centre taps structurally zero -> skip them --
        mc_w = uni((KERNEL_SIZE, HIDDEN, HIDDEN), KERNEL_SIZE * HIDDEN)
        mc_b = uni((1, HIDDEN), KERNEL_SIZE * HIDDEN)
        w_taps += [pad_w(mc_w[k]) for k in mask_conv_taps(i)]
        biases.append(pad_b(mc_b))

    w_blob = jnp.concatenate(w_taps, axis=0).astype(jnp.bfloat16)  # (T*CPAD, CPAD)
    b_blob = jnp.stack(biases)                                     # (NB, 1, CPAD) f32
    return w_blob, b_blob


# ----------------------------------------------------------------------------
# Pallas kernel: full NPC forward for the whole (batch-folded) slab.
# ----------------------------------------------------------------------------
def npc_kernel(L, x_ref, w_ref, b_ref, o_ref):
    M, C = x_ref.shape                                   # (B*L, CPAD)
    # Per-utterance row position, computed once and reused by every layer.
    tpos = jax.lax.broadcasted_iota(jnp.int32, (M, 1), 0) % L

    cur = {"w": 0, "b": 0}
    mask_cache = {}                                      # one compare per distinct shift

    def edge_mask(s):
        if s not in mask_cache:
            mask_cache[s] = (tpos >= s) if s > 0 else (tpos < L + s)
        return mask_cache[s]

    def take_w(n_taps):
        off = cur["w"]; cur["w"] += n_taps
        return w_ref[pl.ds(off * CPAD, n_taps * CPAD), :]   # (n_taps*CPAD, CPAD) bf16

    def take_b():
        j = cur["b"]; cur["b"] += 1
        return b_ref[j]                                      # (1, CPAD) f32

    def conv_same(x, ks, pad):
        # "same" zero-padded conv over time, taps fused along the contraction:
        # for each tap k build the shifted (pltpu.roll, XLU) + edge/utterance
        # masked input copy, concatenate on lanes, run ONE MXU matmul per layer.
        # TODO(synk): for the real config (K=15 -> shifts up to 7) guard tiles
        # shorter than the max shift; roll+single-mask assumes |shift| < L.
        cols = []
        for k in ks:
            s = pad - k                                  # static shift
            if s == 0:
                cols.append(x)
            else:
                y = pltpu.roll(x, shift=s % M, axis=0)
                cols.append(jnp.where(edge_mask(s), y, 0.0))
        x_cat = cols[0] if len(cols) == 1 else jnp.concatenate(cols, axis=1)
        y = jnp.dot(x_cat.astype(jnp.bfloat16), take_w(len(ks)),
                    preferred_element_type=jnp.float32)
        return y + take_b()

    h = x_ref[...].astype(jnp.float32)                   # (M, CPAD)
    feat = jnp.zeros((M, C), jnp.float32)

    # TODO(synk): for the real NPC config (hidden=512, long utterances) replace
    # the unrolled Python loops with lax.fori_loop / a time-tile grid axis with
    # a (K-1)//2 halo, single-buffer the grid-invariant weight blob
    # (pl.Buffered(1) or pl.ANY + sync_copy), and shard the tile axis across
    # v7x's two TensorCores (CORE_PARALLEL).  Unnecessary at these toy shapes.
    for i in range(N_BLOCKS):
        # --- ConvBlock (eval: BN folded into weights, dropout = identity)
        res_in = h
        out = jnp.maximum(conv_same(h, range(3), 1), 0.0)     # conv1+bn1 -> relu
        out = conv_same(out, range(3), 1)                     # conv2+bn2
        if i == 0:
            res = jnp.dot(res_in.astype(jnp.bfloat16), take_w(1),
                          preferred_element_type=jnp.float32) + take_b()
        else:
            res = res_in
        h = jnp.maximum(out + res, 0.0)

        # --- MaskConvBlock, accumulated across layers (cross-layer ReLU sum)
        m = conv_same(h, mask_conv_taps(i), (KERNEL_SIZE - 1) // 2)
        feat = feat + jnp.maximum(m, 0.0)

    o_ref[...] = feat                                    # lane-dense (B*L, 128) store


def npc_forward(features_padded, w_blob, b_blob):
    """features_padded: (B, L, FEAT_DIM) f32 -> masked feat (B, L, HIDDEN) f32."""
    B, L, Din = features_padded.shape
    M = B * L
    # lane-dense + bf16 input (bit-identical to the in-kernel cast, half the DMA)
    x = jnp.pad(features_padded, ((0, 0), (0, 0), (0, CPAD - Din)))
    x = x.reshape(M, CPAD).astype(jnp.bfloat16)
    TW = w_blob.shape[0]
    NB = b_blob.shape[0]
    feat = pl.pallas_call(
        functools.partial(npc_kernel, L),
        grid=(1,),                                   # batch folded into matmul M dim
        in_specs=[pl.BlockSpec((M, CPAD), lambda i: (0, 0)),
                  pl.BlockSpec((TW, CPAD), lambda i: (0, 0)),
                  pl.BlockSpec((NB, 1, CPAD), lambda i: (0, 0, 0))],
        out_specs=pl.BlockSpec((M, CPAD), lambda i: (0, 0)),
        out_shape=jax.ShapeDtypeStruct((M, CPAD), jnp.float32),
        compiler_params=pltpu.CompilerParams(
            dimension_semantics=("arbitrary",),
            vmem_limit_bytes=32 * 1024 * 1024),      # raise (with headroom) for real config
    )(x, w_blob, b_blob)
    return feat.reshape(B, L, CPAD)[:, :, :HIDDEN]


# ----------------------------------------------------------------------------
# Plain-JAX reference mirroring the kernel numerics (same folded/padded bf16
# blobs; conv expressed as zero-pad + per-tap slice instead of roll + mask).
# ----------------------------------------------------------------------------
def npc_forward_ref(features_padded, w_blob, b_blob):
    B, L, Din = features_padded.shape

    def single(x):
        xc = jnp.pad(x, ((0, 0), (0, CPAD - Din)))
        cur = {"w": 0, "b": 0}

        def take_w(n):
            off = cur["w"]; cur["w"] += n
            return w_blob[off * CPAD:(off + n) * CPAD]

        def take_b():
            j = cur["b"]; cur["b"] += 1
            return b_blob[j]

        def conv_same(h, ks, pad):
            hp = jnp.pad(h.astype(jnp.bfloat16), ((pad, pad), (0, 0)))
            w = take_w(len(ks))
            acc = jnp.zeros((L, CPAD), jnp.float32)
            for j, k in enumerate(ks):
                acc = acc + jnp.dot(hp[k:k + L], w[j * CPAD:(j + 1) * CPAD],
                                    preferred_element_type=jnp.float32)
            return acc + take_b()

        h = xc.astype(jnp.bfloat16).astype(jnp.float32)
        feat = jnp.zeros((L, CPAD), jnp.float32)
        for i in range(N_BLOCKS):
            res_in = h
            out = jnp.maximum(conv_same(h, range(3), 1), 0.0)
            out = conv_same(out, range(3), 1)
            if i == 0:
                res = jnp.dot(res_in.astype(jnp.bfloat16), take_w(1),
                              preferred_element_type=jnp.float32) + take_b()
            else:
                res = res_in
            h = jnp.maximum(out + res, 0.0)
            feat = feat + jnp.maximum(
                conv_same(h, mask_conv_taps(i), (KERNEL_SIZE - 1) // 2), 0.0)
        return feat[:, :HIDDEN]

    return jax.vmap(single)(features_padded)


# ----------------------------------------------------------------------------
if __name__ == "__main__":
    key = jax.random.PRNGKey(0)
    k_wav, k_mel, k_par = jax.random.split(key, 3)

    wav_lens = [2800, 2160]  # -> 16 and 12 frames at hop=160, win=400
    wavs = [jax.random.normal(jax.random.fold_in(k_wav, i), (n,), jnp.float32)
            for i, n in enumerate(wav_lens)]

    # TODO(synk): the real preprocessor (create_transform) is an FFT-based log-mel
    # spectrogram; approximated here as framing + fixed linear projection + log.
    W_mel = jax.random.normal(k_mel, (WIN, FEAT_DIM), jnp.float32) / np.sqrt(WIN)
    window = jnp.asarray(np.hanning(WIN), jnp.float32)

    def preprocess(wav):
        n_frames = 1 + (wav.shape[0] - WIN) // HOP
        idx = jnp.arange(n_frames)[:, None] * HOP + jnp.arange(WIN)[None, :]
        frames = wav[idx] * window[None, :]
        return jnp.log(jnp.abs(frames @ W_mel) + 1e-6)        # (n_frames, FEAT_DIM)

    feats = [preprocess(w) for w in wavs]
    feat_lengths = [f.shape[0] for f in feats]
    L = max(feat_lengths)
    features_padded = jnp.stack(
        [jnp.pad(f, ((0, L - f.shape[0]), (0, 0))) for f in feats])  # pad_sequence

    w_blob, b_blob = init_params(k_par)

    # 'masked' feature selection -> the masked feats; pred/postnet never computed.
    feat = npc_forward(features_padded, w_blob, b_blob)
    jax.block_until_ready(feat)

    feat_ref = npc_forward_ref(features_padded, w_blob, b_blob)
    np.testing.assert_allclose(np.asarray(feat), np.asarray(feat_ref),
                               rtol=1e-2, atol=1e-2)

    # UpstreamExpert returns the list of unpadded per-utterance features.
    features = [feat[i, :l] for i, l in enumerate(feat_lengths)]
    assert features[0].shape == (16, HIDDEN) and features[1].shape == (12, HIDDEN)

    print("KERNEL_OK")
</pallas_src>

<mosaic_0001>
module attributes {stable_mosaic.version = 11 : i64} {
  func.func @npc_kernel(%arg0: i32, %arg1: memref<32x128xbf16, #tpu.memory_space<vmem>>, %arg2: memref<2432x128xbf16, #tpu.memory_space<vmem>>, %arg3: memref<7x1x128xf32, #tpu.memory_space<vmem>>, %arg4: memref<32x128xf32, #tpu.memory_space<vmem>>) attributes {dimension_semantics = [#tpu.dimension_semantics<arbitrary>], iteration_bounds = array<i64: 1>, scalar_prefetch = 0 : i64, scratch_operands = 0 : i64, tpu.core_type = #tpu.core_type<tc>, window_params = [{pipeline_mode = #tpu.pipeline_mode<synchronous>, transform_indices = @transform_0, window_bounds = array<i64: 32, 128>}, {pipeline_mode = #tpu.pipeline_mode<synchronous>, transform_indices = @transform_1, window_bounds = array<i64: 2432, 128>}, {pipeline_mode = #tpu.pipeline_mode<synchronous>, transform_indices = @transform_2, window_bounds = array<i64: 7, 1, 128>}, {pipeline_mode = #tpu.pipeline_mode<synchronous>, transform_indices = @transform_3, window_bounds = array<i64: 32, 128>}]} {
    %0 = tpu.iota {dimensions = array<i32: 0>} : vector<32x1xi32>
    %c16_i32 = arith.constant 16 : i32
    %c0_i32 = arith.constant 0 : i32
    %1 = arith.cmpi eq, %c16_i32, %c0_i32 : i32
    %c1_i32 = arith.constant 1 : i32
    %2 = arith.select %1, %c1_i32, %c16_i32 : i32
    %3 = vector.broadcast %2 : i32 to vector<32x1xi32>
    %4 = arith.remsi %0, %3 : vector<32x1xi32>
    %c0_i32_0 = arith.constant 0 : i32
    %5 = vector.broadcast %c0_i32_0 : i32 to vector<32x1xi32>
    %6 = arith.cmpi ne, %4, %5 : vector<32x1xi32>
    %c0_i32_1 = arith.constant 0 : i32
    %7 = vector.broadcast %c0_i32_1 : i32 to vector<32x1xi32>
    %8 = arith.cmpi slt, %4, %7 : vector<32x1xi32>
    %c0_i32_2 = arith.constant 0 : i32
    %9 = arith.cmpi slt, %2, %c0_i32_2 : i32
    %10 = vector.broadcast %9 : i1 to vector<32x1xi1>
    %11 = vector.broadcast %10 : vector<32x1xi1> to vector<32x1xi1>
    %12 = arith.xori %8, %11 : vector<32x1xi1>
    %13 = arith.andi %12, %6 : vector<32x1xi1>
    %14 = vector.broadcast %2 : i32 to vector<32x1xi32>
    %15 = arith.addi %4, %14 : vector<32x1xi32>
    %16 = arith.select %13, %15, %4 : vector<32x1xi1>, vector<32x1xi32>
    %c0 = arith.constant 0 : index
    %c0_3 = arith.constant 0 : index
    %17 = vector.load %arg1[%c0, %c0_3] : memref<32x128xbf16, #tpu.memory_space<vmem>>, vector<32x128xbf16>
    %18 = arith.extf %17 : vector<32x128xbf16> to vector<32x128xf32>
    %cst = arith.constant 0.000000e+00 : f32
    %19 = vector.broadcast %cst : f32 to vector<32x128xf32>
    %c1_i32_4 = arith.constant 1 : i32
    %20 = tpu.dynamic_rotate %18 by %c1_i32_4 dim 0 : vector<32x128xf32>, i32 -> vector<32x128xf32>
    %c1_i32_5 = arith.constant 1 : i32
    %21 = vector.broadcast %c1_i32_5 : i32 to vector<32x1xi32>
    %22 = arith.cmpi sge, %16, %21 : vector<32x1xi32>
    %cst_6 = arith.constant 0.000000e+00 : f32
    %23 = vector.shape_cast %22 : vector<32x1xi1> to vector<32x1xi1>
    %24 = vector.broadcast %23 : vector<32x1xi1> to vector<32x128xi1>
    %25 = vector.broadcast %cst_6 : f32 to vector<32x128xf32>
    %26 = arith.select %24, %20, %25 : vector<32x128xi1>, vector<32x128xf32>
    %c31_i32 = arith.constant 31 : i32
    %27 = tpu.dynamic_rotate %18 by %c31_i32 dim 0 : vector<32x128xf32>, i32 -> vector<32x128xf32>
    %c15_i32 = arith.constant 15 : i32
    %28 = vector.broadcast %c15_i32 : i32 to vector<32x1xi32>
    %29 = arith.cmpi slt, %16, %28 : vector<32x1xi32>
    %cst_7 = arith.constant 0.000000e+00 : f32
    %30 = vector.shape_cast %29 : vector<32x1xi1> to vector<32x1xi1>
    %31 = vector.broadcast %30 : vector<32x1xi1> to vector<32x128xi1>
    %32 = vector.broadcast %cst_7 : f32 to vector<32x128xf32>
    %33 = arith.select %31, %27, %32 : vector<32x128xi1>, vector<32x128xf32>
    %34 = tpu.concatenate %26, %18, %33 in 1 : vector<32x128xf32>, vector<32x128xf32>, vector<32x128xf32> -> vector<32x384xf32>
    %35 = arith.truncf %34 : vector<32x384xf32> to vector<32x384xbf16>
    %c0_8 = arith.constant 0 : index
    %c0_9 = arith.constant 0 : index
    %36 = vector.load %arg2[%c0_8, %c0_9] : memref<2432x128xbf16, #tpu.memory_space<vmem>>, vector<384x128xbf16>
    %cst_10 = arith.constant dense<0.000000e+00> : vector<32x128xf32>
    %37 = tpu.matmul %35, %36, %cst_10 {dimension_numbers = #tpu.dot_dimension_numbers<[1], [0], [0], [1], [0, 0, 1, 1], [], []>} : vector<32x384xbf16>, vector<384x128xbf16>, vector<32x128xf32> -> vector<32x128xf32>
    %c0_11 = arith.constant 0 : index
    %c0_12 = arith.constant 0 : index
    %c0_13 = arith.constant 0 : index
    %38 = vector.load %arg3[%c0_11, %c0_12, %c0_13] : memref<7x1x128xf32, #tpu.memory_space<vmem>>, vector<1x1x128xf32>
    %39 = vector.shape_cast %38 : vector<1x1x128xf32> to vector<1x128xf32>
    %40 = vector.broadcast %39 : vector<1x128xf32> to vector<32x128xf32>
    %41 = arith.addf %37, %40 : vector<32x128xf32>
    %cst_14 = arith.constant 0.000000e+00 : f32
    %42 = vector.broadcast %cst_14 : f32 to vector<32x128xf32>
    %43 = arith.maximumf %41, %42 : vector<32x128xf32>
    %c1_i32_15 = arith.constant 1 : i32
    %44 = tpu.dynamic_rotate %43 by %c1_i32_15 dim 0 : vector<32x128xf32>, i32 -> vector<32x128xf32>
    %cst_16 = arith.constant 0.000000e+00 : f32
    %45 = vector.shape_cast %22 : vector<32x1xi1> to vector<32x1xi1>
    %46 = vector.broadcast %45 : vector<32x1xi1> to vector<32x128xi1>
    %47 = vector.broadcast %cst_16 : f32 to vector<32x128xf32>
    %48 = arith.select %46, %44, %47 : vector<32x128xi1>, vector<32x128xf32>
    %c31_i32_17 = arith.constant 31 : i32
    %49 = tpu.dynamic_rotate %43 by %c31_i32_17 dim 0 : vector<32x128xf32>, i32 -> vector<32x128xf32>
    %cst_18 = arith.constant 0.000000e+00 : f32
    %50 = vector.shape_cast %29 : vector<32x1xi1> to vector<32x1xi1>
    %51 = vector.broadcast %50 : vector<32x1xi1> to vector<32x128xi1>
    %52 = vector.broadcast %cst_18 : f32 to vector<32x128xf32>
    %53 = arith.select %51, %49, %52 : vector<32x128xi1>, vector<32x128xf32>
    %54 = tpu.concatenate %48, %43, %53 in 1 : vector<32x128xf32>, vector<32x128xf32>, vector<32x128xf32> -> vector<32x384xf32>
    %55 = arith.truncf %54 : vector<32x384xf32> to vector<32x384xbf16>
    %c384 = arith.constant 384 : index
    %c0_19 = arith.constant 0 : index
    %56 = vector.load %arg2[%c384, %c0_19] : memref<2432x128xbf16, #tpu.memory_space<vmem>>, vector<384x128xbf16>
    %cst_20 = arith.constant dense<0.000000e+00> : vector<32x128xf32>
    %57 = tpu.matmul %55, %56, %cst_20 {dimension_numbers = #tpu.dot_dimension_numbers<[1], [0], [0], [1], [0, 0, 1, 1], [], []>} : vector<32x384xbf16>, vector<384x128xbf16>, vector<32x128xf32> -> vector<32x128xf32>
    %c1 = arith.constant 1 : index
    %c0_21 = arith.constant 0 : index
    %c0_22 = arith.constant 0 : index
    %58 = vector.load %arg3[%c1, %c0_21, %c0_22] : memref<7x1x128xf32, #tpu.memory_space<vmem>>, vector<1x1x128xf32>
    %59 = vector.shape_cast %58 : vector<1x1x128xf32> to vector<1x128xf32>
    %60 = vector.broadcast %59 : vector<1x128xf32> to vector<32x128xf32>
    %61 = arith.addf %57, %60 : vector<32x128xf32>
    %62 = arith.truncf %18 : vector<32x128xf32> to vector<32x128xbf16>
    %c768 = arith.constant 768 : index
    %c0_23 = arith.constant 0 : index
    %63 = vector.load %arg2[%c768, %c0_23] : memref<2432x128xbf16, #tpu.memory_space<vmem>>, vector<128x128xbf16>
    %cst_24 = arith.constant dense<0.000000e+00> : vector<32x128xf32>
    %64 = tpu.matmul %62, %63, %cst_24 {dimension_numbers = #tpu.dot_dimension_numbers<[1], [0], [0], [1], [0, 0, 1, 1], [], []>} : vector<32x128xbf16>, vector<128x128xbf16>, vector<32x128xf32> -> vector<32x128xf32>
    %c2 = arith.constant 2 : index
    %c0_25 = arith.constant 0 : index
    %c0_26 = arith.constant 0 : index
    %65 = vector.load %arg3[%c2, %c0_25, %c0_26] : memref<7x1x128xf32, #tpu.memory_space<vmem>>, vector<1x1x128xf32>
    %66 = vector.shape_cast %65 : vector<1x1x128xf32> to vector<1x128xf32>
    %67 = vector.broadcast %66 : vector<1x128xf32> to vector<32x128xf32>
    %68 = arith.addf %64, %67 : vector<32x128xf32>
    %69 = arith.addf %61, %68 : vector<32x128xf32>
    %cst_27 = arith.constant 0.000000e+00 : f32
    %70 = vector.broadcast %cst_27 : f32 to vector<32x128xf32>
    %71 = arith.maximumf %69, %70 : vector<32x128xf32>
    %c4_i32 = arith.constant 4 : i32
    %72 = tpu.dynamic_rotate %71 by %c4_i32 dim 0 : vector<32x128xf32>, i32 -> vector<32x128xf32>
    %c4_i32_28 = arith.constant 4 : i32
    %73 = vector.broadcast %c4_i32_28 : i32 to vector<32x1xi32>
    %74 = arith.cmpi sge, %16, %73 : vector<32x1xi32>
    %cst_29 = arith.constant 0.000000e+00 : f32
    %75 = vector.shape_cast %74 : vector<32x1xi1> to vector<32x1xi1>
    %76 = vector.broadcast %75 : vector<32x1xi1> to vector<32x128xi1>
    %77 = vector.broadcast %cst_29 : f32 to vector<32x128xf32>
    %78 = arith.select %76, %72, %77 : vector<32x128xi1>, vector<32x128xf32>
    %c3_i32 = arith.constant 3 : i32
    %79 = tpu.dynamic_rotate %71 by %c3_i32 dim 0 : vector<32x128xf32>, i32 -> vector<32x128xf32>
    %c3_i32_30 = arith.constant 3 : i32
    %80 = vector.broadcast %c3_i32_30 : i32 to vector<32x1xi32>
    %81 = arith.cmpi sge, %16, %80 : vector<32x1xi32>
    %cst_31 = arith.constant 0.000000e+00 : f32
    %82 = vector.shape_cast %81 : vector<32x1xi1> to vector<32x1xi1>
    %83 = vector.broadcast %82 : vector<32x1xi1> to vector<32x128xi1>
    %84 = vector.broadcast %cst_31 : f32 to vector<32x128xf32>
    %85 = arith.select %83, %79, %84 : vector<32x128xi1>, vector<32x128xf32>
    %c29_i32 = arith.constant 29 : i32
    %86 = tpu.dynamic_rotate %71 by %c29_i32 dim 0 : vector<32x128xf32>, i32 -> vector<32x128xf32>
    %c13_i32 = arith.constant 13 : i32
    %87 = vector.broadcast %c13_i32 : i32 to vector<32x1xi32>
    %88 = arith.cmpi slt, %16, %87 : vector<32x1xi32>
    %cst_32 = arith.constant 0.000000e+00 : f32
    %89 = vector.shape_cast %88 : vector<32x1xi1> to vector<32x1xi1>
    %90 = vector.broadcast %89 : vector<32x1xi1> to vector<32x128xi1>
    %91 = vector.broadcast %cst_32 : f32 to vector<32x128xf32>
    %92 = arith.select %90, %86, %91 : vector<32x128xi1>, vector<32x128xf32>
    %c28_i32 = arith.constant 28 : i32
    %93 = tpu.dynamic_rotate %71 by %c28_i32 dim 0 : vector<32x128xf32>, i32 -> vector<32x128xf32>
    %c12_i32 = arith.constant 12 : i32
    %94 = vector.broadcast %c12_i32 : i32 to vector<32x1xi32>
    %95 = arith.cmpi slt, %16, %94 : vector<32x1xi32>
    %cst_33 = arith.constant 0.000000e+00 : f32
    %96 = vector.shape_cast %95 : vector<32x1xi1> to vector<32x1xi1>
    %97 = vector.broadcast %96 : vector<32x1xi1> to vector<32x128xi1>
    %98 = vector.broadcast %cst_33 : f32 to vector<32x128xf32>
    %99 = arith.select %97, %93, %98 : vector<32x128xi1>, vector<32x128xf32>
    %100 = tpu.concatenate %78, %85, %92, %99 in 1 : vector<32x128xf32>, vector<32x128xf32>, vector<32x128xf32>, vector<32x128xf32> -> vector<32x512xf32>
    %101 = arith.truncf %100 : vector<32x512xf32> to vector<32x512xbf16>
    %c896 = arith.constant 896 : index
    %c0_34 = arith.constant 0 : index
    %102 = vector.load %arg2[%c896, %c0_34] : memref<2432x128xbf16, #tpu.memory_space<vmem>>, vector<512x128xbf16>
    %cst_35 = arith.constant dense<0.000000e+00> : vector<32x128xf32>
    %103 = tpu.matmul %101, %102, %cst_35 {dimension_numbers = #tpu.dot_dimension_numbers<[1], [0], [0], [1], [0, 0, 1, 1], [], []>} : vector<32x512xbf16>, vector<512x128xbf16>, vector<32x128xf32> -> vector<32x128xf32>
    %c3 = arith.constant 3 : index
    %c0_36 = arith.constant 0 : index
    %c0_37 = arith.constant 0 : index
    %104 = vector.load %arg3[%c3, %c0_36, %c0_37] : memref<7x1x128xf32, #tpu.memory_space<vmem>>, vector<1x1x128xf32>
    %105 = vector.shape_cast %104 : vector<1x1x128xf32> to vector<1x128xf32>
    %106 = vector.broadcast %105 : vector<1x128xf32> to vector<32x128xf32>
    %107 = arith.addf %103, %106 : vector<32x128xf32>
    %cst_38 = arith.constant 0.000000e+00 : f32
    %108 = vector.broadcast %cst_38 : f32 to vector<32x128xf32>
    %109 = arith.maximumf %107, %108 : vector<32x128xf32>
    %110 = arith.addf %19, %109 : vector<32x128xf32>
    %c1_i32_39 = arith.constant 1 : i32
    %111 = tpu.dynamic_rotate %71 by %c1_i32_39 dim 0 : vector<32x128xf32>, i32 -> vector<32x128xf32>
    %cst_40 = arith.constant 0.000000e+00 : f32
    %112 = vector.shape_cast %22 : vector<32x1xi1> to vector<32x1xi1>
    %113 = vector.broadcast %112 : vector<32x1xi1> to vector<32x128xi1>
    %114 = vector.broadcast %cst_40 : f32 to vector<32x128xf32>
    %115 = arith.select %113, %111, %114 : vector<32x128xi1>, vector<32x128xf32>
    %c31_i32_41 = arith.constant 31 : i32
    %116 = tpu.dynamic_rotate %71 by %c31_i32_41 dim 0 : vector<32x128xf32>, i32 -> vector<32x128xf32>
    %cst_42 = arith.constant 0.000000e+00 : f32
    %117 = vector.shape_cast %29 : vector<32x1xi1> to vector<32x1xi1>
    %118 = vector.broadcast %117 : vector<32x1xi1> to vector<32x128xi1>
    %119 = vector.broadcast %cst_42 : f32 to vector<32x128xf32>
    %120 = arith.select %118, %116, %119 : vector<32x128xi1>, vector<32x128xf32>
    %121 = tpu.concatenate %115, %71, %120 in 1 : vector<32x128xf32>, vector<32x128xf32>, vector<32x128xf32> -> vector<32x384xf32>
    %122 = arith.truncf %121 : vector<32x384xf32> to vector<32x384xbf16>
    %c1408 = arith.constant 1408 : index
    %c0_43 = arith.constant 0 : index
    %123 = vector.load %arg2[%c1408, %c0_43] : memref<2432x128xbf16, #tpu.memory_space<vmem>>, vector<384x128xbf16>
    %cst_44 = arith.constant dense<0.000000e+00> : vector<32x128xf32>
    %124 = tpu.matmul %122, %123, %cst_44 {dimension_numbers = #tpu.dot_dimension_numbers<[1], [0], [0], [1], [0, 0, 1, 1], [], []>} : vector<32x384xbf16>, vector<384x128xbf16>, vector<32x128xf32> -> vector<32x128xf32>
    %c4 = arith.constant 4 : index
    %c0_45 = arith.constant 0 : index
    %c0_46 = arith.constant 0 : index
    %125 = vector.load %arg3[%c4, %c0_45, %c0_46] : memref<7x1x128xf32, #tpu.memory_space<vmem>>, vector<1x1x128xf32>
    %126 = vector.shape_cast %125 : vector<1x1x128xf32> to vector<1x128xf32>
    %127 = vector.broadcast %126 : vector<1x128xf32> to vector<32x128xf32>
    %128 = arith.addf %124, %127 : vector<32x128xf32>
    %cst_47 = arith.constant 0.000000e+00 : f32
    %129 = vector.broadcast %cst_47 : f32 to vector<32x128xf32>
    %130 = arith.maximumf %128, %129 : vector<32x128xf32>
    %c1_i32_48 = arith.constant 1 : i32
    %131 = tpu.dynamic_rotate %130 by %c1_i32_48 dim 0 : vector<32x128xf32>, i32 -> vector<32x128xf32>
    %cst_49 = arith.constant 0.000000e+00 : f32
    %132 = vector.shape_cast %22 : vector<32x1xi1> to vector<32x1xi1>
    %133 = vector.broadcast %132 : vector<32x1xi1> to vector<32x128xi1>
    %134 = vector.broadcast %cst_49 : f32 to vector<32x128xf32>
    %135 = arith.select %133, %131, %134 : vector<32x128xi1>, vector<32x128xf32>
    %c31_i32_50 = arith.constant 31 : i32
    %136 = tpu.dynamic_rotate %130 by %c31_i32_50 dim 0 : vector<32x128xf32>, i32 -> vector<32x128xf32>
    %cst_51 = arith.constant 0.000000e+00 : f32
    %137 = vector.shape_cast %29 : vector<32x1xi1> to vector<32x1xi1>
    %138 = vector.broadcast %137 : vector<32x1xi1> to vector<32x128xi1>
    %139 = vector.broadcast %cst_51 : f32 to vector<32x128xf32>
    %140 = arith.select %138, %136, %139 : vector<32x128xi1>, vector<32x128xf32>
    %141 = tpu.concatenate %135, %130, %140 in 1 : vector<32x128xf32>, vector<32x128xf32>, vector<32x128xf32> -> vector<32x384xf32>
    %142 = arith.truncf %141 : vector<32x384xf32> to vector<32x384xbf16>
    %c1792 = arith.constant 1792 : index
    %c0_52 = arith.constant 0 : index
    %143 = vector.load %arg2[%c1792, %c0_52] : memref<2432x128xbf16, #tpu.memory_space<vmem>>, vector<384x128xbf16>
    %cst_53 = arith.constant dense<0.000000e+00> : vector<32x128xf32>
    %144 = tpu.matmul %142, %143, %cst_53 {dimension_numbers = #tpu.dot_dimension_numbers<[1], [0], [0], [1], [0, 0, 1, 1], [], []>} : vector<32x384xbf16>, vector<384x128xbf16>, vector<32x128xf32> -> vector<32x128xf32>
    %c5 = arith.constant 5 : index
    %c0_54 = arith.constant 0 : index
    %c0_55 = arith.constant 0 : index
    %145 = vector.load %arg3[%c5, %c0_54, %c0_55] : memref<7x1x128xf32, #tpu.memory_space<vmem>>, vector<1x1x128xf32>
    %146 = vector.shape_cast %145 : vector<1x1x128xf32> to vector<1x128xf32>
    %147 = vector.broadcast %146 : vector<1x128xf32> to vector<32x128xf32>
    %148 = arith.addf %144, %147 : vector<32x128xf32>
    %149 = arith.addf %148, %71 : vector<32x128xf32>
    %cst_56 = arith.constant 0.000000e+00 : f32
    %150 = vector.broadcast %cst_56 : f32 to vector<32x128xf32>
    %151 = arith.maximumf %149, %150 : vector<32x128xf32>
    %c4_i32_57 = arith.constant 4 : i32
    %152 = tpu.dynamic_rotate %151 by %c4_i32_57 dim 0 : vector<32x128xf32>, i32 -> vector<32x128xf32>
    %cst_58 = arith.constant 0.000000e+00 : f32
    %153 = vector.shape_cast %74 : vector<32x1xi1> to vector<32x1xi1>
    %154 = vector.broadcast %153 : vector<32x1xi1> to vector<32x128xi1>
    %155 = vector.broadcast %cst_58 : f32 to vector<32x128xf32>
    %156 = arith.select %154, %152, %155 : vector<32x128xi1>, vector<32x128xf32>
    %c28_i32_59 = arith.constant 28 : i32
    %157 = tpu.dynamic_rotate %151 by %c28_i32_59 dim 0 : vector<32x128xf32>, i32 -> vector<32x128xf32>
    %cst_60 = arith.constant 0.000000e+00 : f32
    %158 = vector.shape_cast %95 : vector<32x1xi1> to vector<32x1xi1>
    %159 = vector.broadcast %158 : vector<32x1xi1> to vector<32x128xi1>
    %160 = vector.broadcast %cst_60 : f32 to vector<32x128xf32>
    %161 = arith.select %159, %157, %160 : vector<32x128xi1>, vector<32x128xf32>
    %162 = tpu.concatenate %156, %161 in 1 : vector<32x128xf32>, vector<32x128xf32> -> vector<32x256xf32>
    %163 = arith.truncf %162 : vector<32x256xf32> to vector<32x256xbf16>
    %c2176 = arith.constant 2176 : index
    %c0_61 = arith.constant 0 : index
    %164 = vector.load %arg2[%c2176, %c0_61] : memref<2432x128xbf16, #tpu.memory_space<vmem>>, vector<256x128xbf16>
    %cst_62 = arith.constant dense<0.000000e+00> : vector<32x128xf32>
    %165 = tpu.matmul %163, %164, %cst_62 {dimension_numbers = #tpu.dot_dimension_numbers<[1], [0], [0], [1], [0, 0, 1, 1], [], []>} : vector<32x256xbf16>, vector<256x128xbf16>, vector<32x128xf32> -> vector<32x128xf32>
    %c6 = arith.constant 6 : index
    %c0_63 = arith.constant 0 : index
    %c0_64 = arith.constant 0 : index
    %166 = vector.load %arg3[%c6, %c0_63, %c0_64] : memref<7x1x128xf32, #tpu.memory_space<vmem>>, vector<1x1x128xf32>
    %167 = vector.shape_cast %166 : vector<1x1x128xf32> to vector<1x128xf32>
    %168 = vector.broadcast %167 : vector<1x128xf32> to vector<32x128xf32>
    %169 = arith.addf %165, %168 : vector<32x128xf32>
    %cst_65 = arith.constant 0.000000e+00 : f32
    %170 = vector.broadcast %cst_65 : f32 to vector<32x128xf32>
    %171 = arith.maximumf %169, %170 : vector<32x128xf32>
    %172 = arith.addf %110, %171 : vector<32x128xf32>
    %c0_66 = arith.constant 0 : index
    %c0_67 = arith.constant 0 : index
    %173 = vector.load %arg4[%c0_66, %c0_67] : memref<32x128xf32, #tpu.memory_space<vmem>>, vector<32x128xf32>
    tpu.vector_store %arg4[%c0_66, %c0_67], %172 {strides = array<i32>} : memref<32x128xf32, #tpu.memory_space<vmem>>, vector<32x128xf32>,
    return
  }
  func.func @transform_0(%arg0: i32) -> (i32, i32) {
    %c0_i32 = arith.constant 0 : i32
    %c0_i32_0 = arith.constant 0 : i32
    %c0_i32_1 = arith.constant 0 : i32
    return %c0_i32, %c0_i32_0 : i32, i32
  }
  func.func @transform_1(%arg0: i32) -> (i32, i32) {
    %c0_i32 = arith.constant 0 : i32
    %c0_i32_0 = arith.constant 0 : i32
    %c0_i32_1 = arith.constant 0 : i32
    return %c0_i32, %c0_i32_0 : i32, i32
  }
  func.func @transform_2(%arg0: i32) -> (i32, i32, i32) {
    %c0_i32 = arith.constant 0 : i32
    %c0_i32_0 = arith.constant 0 : i32
    %c0_i32_1 = arith.constant 0 : i32
    %c0_i32_2 = arith.constant 0 : i32
    return %c0_i32, %c0_i32_0, %c0_i32_1 : i32, i32, i32
  }
  func.func @transform_3(%arg0: i32) -> (i32, i32) {
    %c0_i32 = arith.constant 0 : i32
    %c0_i32_0 = arith.constant 0 : i32
    %c0_i32_1 = arith.constant 0 : i32
    return %c0_i32, %c0_i32_0 : i32, i32
  }
}

</mosaic_0001>

<llo_original>
// kernel: tpu_custom_call.1
$region0: #{tpu_custom_call.1}
  #allocation0 [shape = 'u32[]', space=smem, size = 0x4, offset = 0x4, fixed_abs, tag = 'smem constant byte address 0x4 - core index']
  #allocation1 [shape = 'u32[144,128]{1,0:T(1,128)}', space=vmem, size = 0x12000, scoped, tag = 'internal scratch']
  %s0 = inlined_call_operand.hbm [shape: bf16[32,128], index: 0, kind: input, shape index: {}]
  %s1 = inlined_call_operand.hbm [shape: bf16[2432,128], index: 1, kind: input, shape index: {}]
  %s2 = inlined_call_operand.vmem [shape: f32[7,1,128], index: 2, kind: input, shape index: {}]
  %s3 = inlined_call_operand.hbm [shape: f32[32,128], index: 3, kind: output, shape index: {}]
  %s4 = sld [smem:[#allocation0]]
  $region30: #{tpu_custom_call.1} parent=0
    _
  %s6 = ssub.s32 1, %s4
  %s7 = scalar_select 0, %s6, %s4
  $region1: #{tpu_custom_call.1} parent=0
    #allocation2 [shape = 'u8[8192]{0}', space=vmem, size = 0x2000, scoped, tag = 'input window, operand 0, single buffered']
    #allocation3 [shape = 's32[1]{0}', space=sflag, size = 0x4, scoped, tag = 'scoped memory for tpu_custom_call.1']
    #allocation4 [shape = 's32[1]{0}', space=sflag, size = 0x4, scoped, tag = 'scoped memory for tpu_custom_call.1']
    #allocation5 [shape = 'u8[622592]{0}', space=vmem, size = 0x98000, scoped, tag = 'input window, operand 1, single buffered']
    #allocation6 [shape = 's32[1]{0}', space=sflag, size = 0x4, scoped, tag = 'scoped memory for tpu_custom_call.1']
    #allocation7 [shape = 'u8[16384]{0}', space=vmem, size = 0x4000, scoped, tag = 'output window, operand 0, single buffered']
    %8 = vsyncpa [#allocation3], 0
    %9 = vsyncpa [#allocation6], 0
    %10 = vsyncpa [#allocation4], 0
    // Predicated region
    $region2: #{tpu_custom_call.1} parent=1 // pred_check
      _
    $region3: #{tpu_custom_call.1} parent=1 // pred_check_branch
      %12 = sbr.rel (0) target = $region5
    $region4: #{tpu_custom_call.1} parent=1 // pred_region
      %s14 = ssub.s32 256, 256
      %15 = vsyncadd [#allocation3], %s14
      %s16 = sshll.u32 [#allocation2], 4
      %s17 = int_to_ptr.vmem [resolvable:$true] %s16
      %22 = dma.hbm_to_vmem [thread:$0]  %s0, 256, %s17, [#allocation3], 64, 64, 4
    $region5: #{tpu_custom_call.1} parent=1 // pred_fallthru
      _
    // Predicated region
    $region6: #{tpu_custom_call.1} parent=1 // pred_check
      _
    $region7: #{tpu_custom_call.1} parent=1 // pred_check_branch
      %24 = sbr.rel (0) target = $region9
    $region8: #{tpu_custom_call.1} parent=1 // pred_region
      %s26 = ssub.s32 19456, 19456
      %27 = vsyncadd [#allocation6], %s26
      %s28 = sshll.u32 [#allocation5], 4
      %s29 = int_to_ptr.vmem [resolvable:$true] %s28
      %34 = dma.hbm_to_vmem [thread:$0]  %s1, 19456, %s29, [#allocation6], 64, 64, 4
    $region9: #{tpu_custom_call.1} parent=1 // pred_fallthru
      _
    // Predicated region
    $region10: #{tpu_custom_call.1} parent=1 // pred_check
      _
    $region11: #{tpu_custom_call.1} parent=1 // pred_check_branch
      %36 = sbr.rel (0) target = $region13
    $region12: #{tpu_custom_call.1} parent=1 // pred_region
      _
    $region13: #{tpu_custom_call.1} parent=1 // pred_fallthru
      _
    // Predicated region
    $region14: #{tpu_custom_call.1} parent=1 // pred_check
      _
    $region15: #{tpu_custom_call.1} parent=1 // pred_check_branch
      %38 = sbr.rel (0) target = $region17
    $region16: #{tpu_custom_call.1} parent=1 // pred_region
      %39 = dma.done [#allocation3], 256
    $region17: #{tpu_custom_call.1} parent=1 // pred_fallthru
      _
    // Predicated region
    $region18: #{tpu_custom_call.1} parent=1 // pred_check
      _
    $region19: #{tpu_custom_call.1} parent=1 // pred_check_branch
      %41 = sbr.rel (0) target = $region21
    $region20: #{tpu_custom_call.1} parent=1 // pred_region
      %42 = dma.done [#allocation6], 19456
    $region21: #{tpu_custom_call.1} parent=1 // pred_fallthru
      _
    %v44 = vlaneseq
    %v45 = vshrl.u32 %v44, 7
    %v46 = vadd.s32 %v45, 8
    %v47 = vadd.s32 %v45, 16
    %v48 = vadd.s32 %v45, 24
    %vm49 = vcmp.lt.s32.totalorder %v45, 0
    %v50 = vsub.s32 0, %v45
    %v51 = vsel %vm49, %v50, %v45
    %v52 = vshrl.u32 %v51, 4
    %v53 = vand.u32 %v51, 15
    %v54 = vsub.s32 0, %v53
    %v55 = vsel %vm49, %v54, %v53
    %vm56 = vcmp.lt.s32.totalorder %v46, 0
    %v57 = vsub.s32 0, %v46
    %v58 = vsel %vm56, %v57, %v46
    %v59 = vshrl.u32 %v58, 4
    %v60 = vand.u32 %v58, 15
    %v61 = vsub.s32 0, %v60
    %v62 = vsel %vm56, %v61, %v60
    %vm63 = vcmp.lt.s32.totalorder %v47, 0
    %v64 = vsub.s32 0, %v47
    %v65 = vsel %vm63, %v64, %v47
    %v66 = vshrl.u32 %v65, 4
    %v67 = vand.u32 %v65, 15
    %v68 = vsub.s32 0, %v67
    %v69 = vsel %vm63, %v68, %v67
    %vm70 = vcmp.lt.s32.totalorder %v48, 0
    %v71 = vsub.s32 0, %v48
    %v72 = vsel %vm70, %v71, %v48
    %v73 = vshrl.u32 %v72, 4
    %v74 = vand.u32 %v72, 15
    %v75 = vsub.s32 0, %v74
    %v76 = vsel %vm70, %v75, %v74
    %vm77 = vcmp.ne.s32.totalorder %v55, 0
    %vm78 = vcmp.ne.s32.totalorder %v62, 0
    %vm79 = vcmp.ne.s32.totalorder %v69, 0
    %vm80 = vcmp.ne.s32.totalorder %v76, 0
    %vm81 = vcmp.lt.s32.totalorder %v55, 0
    %vm82 = vcmp.lt.s32.totalorder %v62, 0
    %vm83 = vcmp.lt.s32.totalorder %v69, 0
    %vm84 = vcmp.lt.s32.totalorder %v76, 0
    %vm85 = vmand %vm81, %vm77
    %vm86 = vmand %vm82, %vm78
    %vm87 = vmand %vm83, %vm79
    %vm88 = vmand %vm84, %vm80
    %v89 = vadd.s32 %v55, 16
    %v90 = vadd.s32 %v62, 16
    %v91 = vadd.s32 %v69, 16
    %v92 = vadd.s32 %v76, 16
    %v93 = vsel %vm85, %v89, %v55
    %v94 = vsel %vm86, %v90, %v62
    %v95 = vsel %vm87, %v91, %v69
    %v96 = vsel %vm88, %v92, %v76
    %v97 = vld [vmem:[#allocation2] sm:$0xf]
    %v98 = vld [vmem:[#allocation2 + $0x4] sm:$0xf]
    %v99 = vld [vmem:[#allocation2 + $0x8] sm:$0xf]
    %v100 = vld [vmem:[#allocation2 + $0xc] sm:$0xf]
    %v101 = vunpack.c.l.bf16 %v97
    %v102 = vunpack.c.l.bf16 %v98
    %v103 = vunpack.c.l.bf16 %v99
    %v104 = vunpack.c.l.bf16 %v100
    %v105 = vrot.slane %v101, 7
    %v106 = vrot.slane %v102, 7
    %v107 = vrot.slane %v103, 7
    %v108 = vrot.slane %v104, 7
    %vm109 = vcmp.lt.s32.totalorder %v45, 1
    %v110 = vsel %vm109, %v107, %v108
    %v111 = vsel %vm109, %v106, %v107
    %v112 = vsel %vm109, %v105, %v106
    %v113 = vsel %vm109, %v108, %v105
    %vm114 = vcmp.ge.s32.totalorder %v93, 1
    %vm115 = vcmp.ge.s32.totalorder %v94, 1
    %vm116 = vcmp.ge.s32.totalorder %v95, 1
    %vm117 = vcmp.ge.s32.totalorder %v96, 1
    %v118 = vsel %vm114, 1, 0
    %v119 = vsel %vm115, 1, 0
    %v120 = vsel %vm116, 1, 0
    %v121 = vsel %vm117, 1, 0
    %vm122 = vcmp.eq.s32.totalorder %v118, 1
    %vm123 = vcmp.eq.s32.totalorder %v119, 1
    %vm124 = vcmp.eq.s32.totalorder %v120, 1
    %vm125 = vcmp.eq.s32.totalorder %v121, 1
    %v126 = vsel %vm122, %v113, 0.0
    %v127 = vsel %vm123, %v112, 0.0
    %v128 = vsel %vm124, %v111, 0.0
    %v129 = vsel %vm125, %v110, 0.0
    %v130 = vrot.slane %v101, 1
    %v131 = vrot.slane %v102, 1
    %v132 = vrot.slane %v103, 1
    %v133 = vrot.slane %v104, 1
    %vm134 = vcmp.lt.s32.totalorder %v45, 7
    %v135 = vsel %vm134, %v132, %v133
    %v136 = vsel %vm134, %v131, %v132
    %v137 = vsel %vm134, %v130, %v131
    %v138 = vsel %vm134, %v133, %v130
    %vm139 = vcmp.lt.s32.totalorder %v93, 15
    %vm140 = vcmp.lt.s32.totalorder %v94, 15
    %vm141 = vcmp.lt.s32.totalorder %v95, 15
    %vm142 = vcmp.lt.s32.totalorder %v96, 15
    %v143 = vsel %vm139, 1, 0
    %v144 = vsel %vm140, 1, 0
    %v145 = vsel %vm141, 1, 0
    %v146 = vsel %vm142, 1, 0
    %vm147 = vcmp.eq.s32.totalorder %v143, 1
    %vm148 = vcmp.eq.s32.totalorder %v144, 1
    %vm149 = vcmp.eq.s32.totalorder %v145, 1
    %vm150 = vcmp.eq.s32.totalorder %v146, 1
    %v151 = vsel %vm147, %v137, 0.0
    %v152 = vsel %vm148, %v136, 0.0
    %v153 = vsel %vm149, %v135, 0.0
    %v154 = vsel %vm150, %v138, 0.0
    %v155 = vpack.c.bf16 %v127, %v126
    %v156 = vpack.c.bf16 %v102, %v101
    %v157 = vpack.c.bf16 %v152, %v151
    %v158 = vpack.c.bf16 %v129, %v128
    %v159 = vpack.c.bf16 %v104, %v103
    %v160 = vpack.c.bf16 %v154, %v153
    %v161 = vld [vmem:[#allocation5] sm:$0xf]
    %v162 = vld [vmem:[#allocation5 + $0x4] sm:$0xf]
    %v163 = vld [vmem:[#allocation5 + $0x8] sm:$0xf]
    %v164 = vld [vmem:[#allocation5 + $0xc] sm:$0xf]
    %v165 = vld [vmem:[#allocation5 + $0x10] sm:$0xf]
    %v166 = vld [vmem:[#allocation5 + $0x14] sm:$0xf]
    %v167 = vld [vmem:[#allocation5 + $0x18] sm:$0xf]
    %v168 = vld [vmem:[#allocation5 + $0x1c] sm:$0xf]
    %v169 = vld [vmem:[#allocation5 + $0x20] sm:$0xf]
    %v170 = vld [vmem:[#allocation5 + $0x24] sm:$0xf]
    %v171 = vld [vmem:[#allocation5 + $0x28] sm:$0xf]
    %v172 = vld [vmem:[#allocation5 + $0x2c] sm:$0xf]
    %v173 = vld [vmem:[#allocation5 + $0x30] sm:$0xf]
    %v174 = vld [vmem:[#allocation5 + $0x34] sm:$0xf]
    %v175 = vld [vmem:[#allocation5 + $0x38] sm:$0xf]
    %v176 = vld [vmem:[#allocation5 + $0x3c] sm:$0xf]
    %v177 = vld [vmem:[#allocation5 + $0x40] sm:$0xf]
    %v178 = vld [vmem:[#allocation5 + $0x44] sm:$0xf]
    %v179 = vld [vmem:[#allocation5 + $0x48] sm:$0xf]
    %v180 = vld [vmem:[#allocation5 + $0x4c] sm:$0xf]
    %v181 = vld [vmem:[#allocation5 + $0x50] sm:$0xf]
    %v182 = vld [vmem:[#allocation5 + $0x54] sm:$0xf]
    %v183 = vld [vmem:[#allocation5 + $0x58] sm:$0xf]
    %v184 = vld [vmem:[#allocation5 + $0x5c] sm:$0xf]
    %v185 = vld [vmem:[#allocation5 + $0x60] sm:$0xf]
    %v186 = vld [vmem:[#allocation5 + $0x64] sm:$0xf]
    %v187 = vld [vmem:[#allocation5 + $0x68] sm:$0xf]
    %v188 = vld [vmem:[#allocation5 + $0x6c] sm:$0xf]
    %v189 = vld [vmem:[#allocation5 + $0x70] sm:$0xf]
    %v190 = vld [vmem:[#allocation5 + $0x74] sm:$0xf]
    %v191 = vld [vmem:[#allocation5 + $0x78] sm:$0xf]
    %v192 = vld [vmem:[#allocation5 + $0x7c] sm:$0xf]
    %v193 = vld [vmem:[#allocation5 + $0x80] sm:$0xf]
    %v194 = vld [vmem:[#allocation5 + $0x84] sm:$0xf]
    %v195 = vld [vmem:[#allocation5 + $0x88] sm:$0xf]
    %v196 = vld [vmem:[#allocation5 + $0x8c] sm:$0xf]
    %v197 = vld [vmem:[#allocation5 + $0x90] sm:$0xf]
    %v198 = vld [vmem:[#allocation5 + $0x94] sm:$0xf]
    %v199 = vld [vmem:[#allocation5 + $0x98] sm:$0xf]
    %v200 = vld [vmem:[#allocation5 + $0x9c] sm:$0xf]
    %v201 = vld [vmem:[#allocation5 + $0xa0] sm:$0xf]
    %v202 = vld [vmem:[#allocation5 + $0xa4] sm:$0xf]
    %v203 = vld [vmem:[#allocation5 + $0xa8] sm:$0xf]
    %v204 = vld [vmem:[#allocation5 + $0xac] sm:$0xf]
    %v205 = vld [vmem:[#allocation5 + $0xb0] sm:$0xf]
    %v206 = vld [vmem:[#allocation5 + $0xb4] sm:$0xf]
    %v207 = vld [vmem:[#allocation5 + $0xb8] sm:$0xf]
    %v208 = vld [vmem:[#allocation5 + $0xbc] sm:$0xf]
    %v209 = vld [vmem:[%s2] sm:$0x1]
    %v211 = vlaneseq
    %v212 = vshrl.u32 %v211, 7
    %v213 = vsub.s32 0, %v212
    %v214 = vrot.slane %v209, %v213
    %v264 = vunpack.c.l.b16 %v161
    %v265 = vunpack.c.l.b16 %v162
    %v266 = vunpack.c.l.b16 %v163
    %v267 = vunpack.c.l.b16 %v164
    %v268 = vunpack.c.l.b16 %v165
    %v269 = vunpack.c.l.b16 %v166
    %v270 = vunpack.c.l.b16 %v167
    %v271 = vunpack.c.l.b16 %v168
    %v272 = vunpack.c.l.b16 %v169
    %v273 = vunpack.c.l.b16 %v170
    %v274 = vunpack.c.l.b16 %v171
    %v275 = vunpack.c.l.b16 %v172
    %v276 = vunpack.c.l.b16 %v173
    %v277 = vunpack.c.l.b16 %v174
    %v278 = vunpack.c.l.b16 %v175
    %v279 = vunpack.c.l.b16 %v176
    %v280 = vunpack.c.l.b16 %v177
    %v281 = vunpack.c.l.b16 %v178
    %v282 = vunpack.c.l.b16 %v179
    %v283 = vunpack.c.l.b16 %v180
    %v284 = vunpack.c.l.b16 %v181
    %v285 = vunpack.c.l.b16 %v182
    %v286 = vunpack.c.l.b16 %v183
    %v287 = vunpack.c.l.b16 %v184
    %v288 = vunpack.c.l.b16 %v185
    %v289 = vunpack.c.l.b16 %v186
    %v290 = vunpack.c.l.b16 %v187
    %v291 = vunpack.c.l.b16 %v188
    %v292 = vunpack.c.l.b16 %v189
    %v293 = vunpack.c.l.b16 %v190
    %v294 = vunpack.c.l.b16 %v191
    %v295 = vunpack.c.l.b16 %v192
    %v296 = vunpack.c.l.b16 %v193
    %v297 = vunpack.c.l.b16 %v194
    %v298 = vunpack.c.l.b16 %v195
    %v299 = vunpack.c.l.b16 %v196
    %v300 = vunpack.c.l.b16 %v197
    %v301 = vunpack.c.l.b16 %v198
    %v302 = vunpack.c.l.b16 %v199
    %v303 = vunpack.c.l.b16 %v200
    %v304 = vunpack.c.l.b16 %v201
    %v305 = vunpack.c.l.b16 %v202
    %v306 = vunpack.c.l.b16 %v203
    %v307 = vunpack.c.l.b16 %v204
    %v308 = vunpack.c.l.b16 %v205
    %v309 = vunpack.c.l.b16 %v206
    %v310 = vunpack.c.l.b16 %v207
    %v311 = vunpack.c.l.b16 %v208
    %v312 = vpack.c.b16 %v265, %v264
    %v313 = vpack.c.b16 %v267, %v266
    %v314 = vpack.c.b16 %v269, %v268
    %v315 = vpack.c.b16 %v271, %v270
    %v316 = vpack.c.b16 %v273, %v272
    %v317 = vpack.c.b16 %v275, %v274
    %v318 = vpack.c.b16 %v277, %v276
    %v319 = vpack.c.b16 %v279, %v278
    %v320 = vpack.c.b16 %v281, %v280
    %v321 = vpack.c.b16 %v283, %v282
    %v322 = vpack.c.b16 %v285, %v284
    %v323 = vpack.c.b16 %v287, %v286
    %v324 = vpack.c.b16 %v289, %v288
    %v325 = vpack.c.b16 %v291, %v290
    %v326 = vpack.c.b16 %v293, %v292
    %v327 = vpack.c.b16 %v295, %v294
    %v328 = vpack.c.b16 %v297, %v296
    %v329 = vpack.c.b16 %v299, %v298
    %v330 = vpack.c.b16 %v301, %v300
    %v331 = vpack.c.b16 %v303, %v302
    %v332 = vpack.c.b16 %v305, %v304
    %v333 = vpack.c.b16 %v307, %v306
    %v334 = vpack.c.b16 %v309, %v308
    %v335 = vpack.c.b16 %v311, %v310
    %360 = vmatprep.subr.bf16.mxu0 0
    %361 = vmatpush1.bf16.msra.mxu0 %v312
    %362 = vmatprep.subr.bf16.mxu0 0
    %363 = vmatpush1.bf16.msra.mxu0 %v313
    %364 = vmatprep.subr.bf16.mxu0 0
    %365 = vmatpush1.bf16.msra.mxu0 %v314
    %366 = vmatprep.subr.bf16.mxu0 0
    %367 = vmatpush1.bf16.msra.mxu0 %v315
    %368 = vmatprep.subr.bf16.mxu0 0
    %369 = vmatpush1.bf16.msra.mxu0 %v316
    %370 = vmatprep.subr.bf16.mxu0 0
    %371 = vmatpush1.bf16.msra.mxu0 %v317
    %372 = vmatprep.subr.bf16.mxu0 0
    %373 = vmatpush1.bf16.msra.mxu0 %v318
    %374 = vmatprep.subr.bf16.mxu0 0
    %375 = vmatpush1.bf16.msra.mxu0 %v319
    %376 = vmatprep.subr.bf16.mxu0 0
    %377 = vmatpush1.bf16.msra.mxu0 %v320
    %378 = vmatprep.subr.bf16.mxu0 0
    %379 = vmatpush1.bf16.msra.mxu0 %v321
    %380 = vmatprep.subr.bf16.mxu0 0
    %381 = vmatpush1.bf16.msra.mxu0 %v322
    %382 = vmatprep.subr.bf16.mxu0 0
    %383 = vmatpush1.bf16.msra.mxu0 %v323
    %384 = vmatprep.subr.bf16.mxu0 0
    %385 = vmatpush1.bf16.msra.mxu0 %v324
    %386 = vmatprep.subr.bf16.mxu0 0
    %387 = vmatpush1.bf16.msra.mxu0 %v325
    %388 = vmatprep.subr.bf16.mxu0 0
    %389 = vmatpush1.bf16.msra.mxu0 %v326
    %390 = vmatprep.subr.bf16.mxu0 0
    %391 = vmatpush1.bf16.msra.mxu0 %v327
    %392 = vmatprep.mubr.bf16.mxu0 %v156
    %393 = vmatmul.mubr.bf16.gmra.mrb[0].mxu0 %v155
    %v394 = vpop.f32.mrb[0].mxu0
    %v395 = vadd.f32 %v214, %v394
    %v396 = vpop.f32.mrb[0].mxu0
    %v397 = vpop.f32.mrb[0].mxu0
    %v398 = vadd.f32 %v214, %v397
    %v399 = vpop.f32.mrb[0].mxu0
    %400 = vmatprep.mubr.bf16.mxu0 %v159
    %401 = vmatmul.mubr.bf16.gmra.mrb[0].mxu0 %v158
    %v402 = vpop.f32.mrb[0].mxu0
    %v403 = vadd.f32 %v214, %v402
    %v404 = vpop.f32.mrb[0].mxu0
    %v405 = vpop.f32.mrb[0].mxu0
    %v406 = vadd.f32 %v214, %v405
    %v407 = vpop.f32.mrb[0].mxu0
    %408 = vdwg.mxu0
    %409 = vmatprep.subr.bf16.mxu0 0
    %410 = vmatpush1.bf16.msra.mxu0 %v328
    %411 = vmatprep.subr.bf16.mxu0 0
    %412 = vmatpush1.bf16.msra.mxu0 %v329
    %413 = vmatprep.subr.bf16.mxu0 0
    %414 = vmatpush1.bf16.msra.mxu0 %v330
    %415 = vmatprep.subr.bf16.mxu0 0
    %416 = vmatpush1.bf16.msra.mxu0 %v331
    %417 = vmatprep.subr.bf16.mxu0 0
    %418 = vmatpush1.bf16.msra.mxu0 %v332
    %419 = vmatprep.subr.bf16.mxu0 0
    %420 = vmatpush1.bf16.msra.mxu0 %v333
    %421 = vmatprep.subr.bf16.mxu0 0
    %422 = vmatpush1.bf16.msra.mxu0 %v334
    %423 = vmatprep.subr.bf16.mxu0 0
    %424 = vmatpush1.bf16.msra.mxu0 %v335
    %425 = vmatprep.subr.bf16.mxu0 0
    %426 = vmatpush1.bf16.msra.mxu0 0
    %427 = vmatprep.subr.bf16.mxu0 0
    %428 = vmatpush1.bf16.msra.mxu0 0
    %429 = vmatprep.subr.bf16.mxu0 0
    %430 = vmatpush1.bf16.msra.mxu0 0
    %431 = vmatprep.subr.bf16.mxu0 0
    %432 = vmatpush1.bf16.msra.mxu0 0
    %433 = vmatprep.subr.bf16.mxu0 0
    %434 = vmatpush1.bf16.msra.mxu0 0
    %435 = vmatprep.subr.bf16.mxu0 0
    %436 = vmatpush1.bf16.msra.mxu0 0
    %437 = vmatprep.subr.bf16.mxu0 0
    %438 = vmatpush1.bf16.msra.mxu0 0
    %439 = vmatprep.subr.bf16.mxu0 0
    %440 = vmatpush1.bf16.msra.mxu0 0
    %441 = vmatprep.mubr.bf16.mxu0 0
    %442 = vmatmul.mubr.bf16.gmra.mrb[0].mxu0 %v157
    %v443 = vpop.f32.mrb[0].mxu0
    %v444 = vadd.f32 %v395, %v443
    %v445 = vpop.f32.mrb[0].mxu0
    %v446 = vpop.f32.mrb[0].mxu0
    %v447 = vadd.f32 %v398, %v446
    %v448 = vpop.f32.mrb[0].mxu0
    %449 = vmatprep.mubr.bf16.mxu0 0
    %450 = vmatmul.mubr.bf16.gmra.mrb[0].mxu0 %v160
    %v451 = vpop.f32.mrb[0].mxu0
    %v452 = vadd.f32 %v403, %v451
    %v453 = vpop.f32.mrb[0].mxu0
    %v454 = vpop.f32.mrb[0].mxu0
    %v455 = vadd.f32 %v406, %v454
    %v456 = vpop.f32.mrb[0].mxu0
    %457 = vdwg.mxu0
    %v458 = vmax.f32 %v444, 0.0
    %v459 = vmax.f32 %v447, 0.0
    %v460 = vmax.f32 %v452, 0.0
    %v461 = vmax.f32 %v455, 0.0
    %v462 = vrot.slane %v458, 7
    %v463 = vrot.slane %v459, 7
    %v464 = vrot.slane %v460, 7
    %v465 = vrot.slane %v461, 7
    %v466 = vsel %vm109, %v464, %v465
    %v467 = vsel %vm109, %v463, %v464
    %v468 = vsel %vm109, %v462, %v463
    %v469 = vsel %vm109, %v465, %v462
    %v470 = vsel %vm122, %v469, 0.0
    %v471 = vsel %vm123, %v468, 0.0
    %v472 = vsel %vm124, %v467, 0.0
    %v473 = vsel %vm125, %v466, 0.0
    %v474 = vrot.slane %v458, 1
    %v475 = vrot.slane %v459, 1
    %v476 = vrot.slane %v460, 1
    %v477 = vrot.slane %v461, 1
    %v478 = vsel %vm134, %v476, %v477
    %v479 = vsel %vm134, %v475, %v476
    %v480 = vsel %vm134, %v474, %v475
    %v481 = vsel %vm134, %v477, %v474
    %v482 = vsel %vm147, %v480, 0.0
    %v483 = vsel %vm148, %v479, 0.0
    %v484 = vsel %vm149, %v478, 0.0
    %v485 = vsel %vm150, %v481, 0.0
    %v486 = vpack.c.bf16 %v471, %v470
    %v487 = vpack.c.bf16 %v459, %v458
    %v488 = vpack.c.bf16 %v483, %v482
    %v489 = vpack.c.bf16 %v473, %v472
    %v490 = vpack.c.bf16 %v461, %v460
    %v491 = vpack.c.bf16 %v485, %v484
    %v492 = vld [vmem:[#allocation5 + $0xc0] sm:$0xf]
    %v493 = vld [vmem:[#allocation5 + $0xc4] sm:$0xf]
    %v494 = vld [vmem:[#allocation5 + $0xc8] sm:$0xf]
    %v495 = vld [vmem:[#allocation5 + $0xcc] sm:$0xf]
    %v496 = vld [vmem:[#allocation5 + $0xd0] sm:$0xf]
    %v497 = vld [vmem:[#allocation5 + $0xd4] sm:$0xf]
    %v498 = vld [vmem:[#allocation5 + $0xd8] sm:$0xf]
    %v499 = vld [vmem:[#allocation5 + $0xdc] sm:$0xf]
    %v500 = vld [vmem:[#allocation5 + $0xe0] sm:$0xf]
    %v501 = vld [vmem:[#allocation5 + $0xe4] sm:$0xf]
    %v502 = vld [vmem:[#allocation5 + $0xe8] sm:$0xf]
    %v503 = vld [vmem:[#allocation5 + $0xec] sm:$0xf]
    %v504 = vld [vmem:[#allocation5 + $0xf0] sm:$0xf]
    %v505 = vld [vmem:[#allocation5 + $0xf4] sm:$0xf]
    %v506 = vld [vmem:[#allocation5 + $0xf8] sm:$0xf]
    %v507 = vld [vmem:[#allocation5 + $0xfc] sm:$0xf]
    %v508 = vld [vmem:[#allocation5 + $0x100] sm:$0xf]
    %v509 = vld [vmem:[#allocation5 + $0x104] sm:$0xf]
    %v510 = vld [vmem:[#allocation5 + $0x108] sm:$0xf]
    %v511 = vld [vmem:[#allocation5 + $0x10c] sm:$0xf]
    %v512 = vld [vmem:[#allocation5 + $0x110] sm:$0xf]
    %v513 = vld [vmem:[#allocation5 + $0x114] sm:$0xf]
    %v514 = vld [vmem:[#allocation5 + $0x118] sm:$0xf]
    %v515 = vld [vmem:[#allocation5 + $0x11c] sm:$0xf]
    %v516 = vld [vmem:[#allocation5 + $0x120] sm:$0xf]
    %v517 = vld [vmem:[#allocation5 + $0x124] sm:$0xf]
    %v518 = vld [vmem:[#allocation5 + $0x128] sm:$0xf]
    %v519 = vld [vmem:[#allocation5 + $0x12c] sm:$0xf]
    %v520 = vld [vmem:[#allocation5 + $0x130] sm:$0xf]
    %v521 = vld [vmem:[#allocation5 + $0x134] sm:$0xf]
    %v522 = vld [vmem:[#allocation5 + $0x138] sm:$0xf]
    %v523 = vld [vmem:[#allocation5 + $0x13c] sm:$0xf]
    %v524 = vld [vmem:[#allocation5 + $0x140] sm:$0xf]
    %v525 = vld [vmem:[#allocation5 + $0x144] sm:$0xf]
    %v526 = vld [vmem:[#allocation5 + $0x148] sm:$0xf]
    %v527 = vld [vmem:[#allocation5 + $0x14c] sm:$0xf]
    %v528 = vld [vmem:[#allocation5 + $0x150] sm:$0xf]
    %v529 = vld [vmem:[#allocation5 + $0x154] sm:$0xf]
    %v530 = vld [vmem:[#allocation5 + $0x158] sm:$0xf]
    %v531 = vld [vmem:[#allocation5 + $0x15c] sm:$0xf]
    %v532 = vld [vmem:[#allocation5 + $0x160] sm:$0xf]
    %v533 = vld [vmem:[#allocation5 + $0x164] sm:$0xf]
    %v534 = vld [vmem:[#allocation5 + $0x168] sm:$0xf]
    %v535 = vld [vmem:[#allocation5 + $0x16c] sm:$0xf]
    %v536 = vld [vmem:[#allocation5 + $0x170] sm:$0xf]
    %v537 = vld [vmem:[#allocation5 + $0x174] sm:$0xf]
    %v538 = vld [vmem:[#allocation5 + $0x178] sm:$0xf]
    %v539 = vld [vmem:[#allocation5 + $0x17c] sm:$0xf]
    %s540 = scalar_lea.vmem %s2, 1
    %v541 = vld [vmem:[%s540] sm:$0x1]
    %v543 = vlaneseq
    %v544 = vshrl.u32 %v543, 7
    %v545 = vsub.s32 0, %v544
    %v546 = vrot.slane %v541, %v545
    %v596 = vunpack.c.l.b16 %v492
    %v597 = vunpack.c.l.b16 %v493
    %v598 = vunpack.c.l.b16 %v494
    %v599 = vunpack.c.l.b16 %v495
    %v600 = vunpack.c.l.b16 %v496
    %v601 = vunpack.c.l.b16 %v497
    %v602 = vunpack.c.l.b16 %v498
    %v603 = vunpack.c.l.b16 %v499
    %v604 = vunpack.c.l.b16 %v500
    %v605 = vunpack.c.l.b16 %v501
    %v606 = vunpack.c.l.b16 %v502
    %v607 = vunpack.c.l.b16 %v503
    %v608 = vunpack.c.l.b16 %v504
    %v609 = vunpack.c.l.b16 %v505
    %v610 = vunpack.c.l.b16 %v506
    %v611 = vunpack.c.l.b16 %v507
    %v612 = vunpack.c.l.b16 %v508
    %v613 = vunpack.c.l.b16 %v509
    %v614 = vunpack.c.l.b16 %v510
    %v615 = vunpack.c.l.b16 %v511
    %v616 = vunpack.c.l.b16 %v512
    %v617 = vunpack.c.l.b16 %v513
    %v618 = vunpack.c.l.b16 %v514
    %v619 = vunpack.c.l.b16 %v515
    %v620 = vunpack.c.l.b16 %v516
    %v621 = vunpack.c.l.b16 %v517
    %v622 = vunpack.c.l.b16 %v518
    %v623 = vunpack.c.l.b16 %v519
    %v624 = vunpack.c.l.b16 %v520
    %v625 = vunpack.c.l.b16 %v521
    %v626 = vunpack.c.l.b16 %v522
    %v627 = vunpack.c.l.b16 %v523
    %v628 = vunpack.c.l.b16 %v524
    %v629 = vunpack.c.l.b16 %v525
    %v630 = vunpack.c.l.b16 %v526
    %v631 = vunpack.c.l.b16 %v527
    %v632 = vunpack.c.l.b16 %v528
    %v633 = vunpack.c.l.b16 %v529
    %v634 = vunpack.c.l.b16 %v530
    %v635 = vunpack.c.l.b16 %v531
    %v636 = vunpack.c.l.b16 %v532
    %v637 = vunpack.c.l.b16 %v533
    %v638 = vunpack.c.l.b16 %v534
    %v639 = vunpack.c.l.b16 %v535
    %v640 = vunpack.c.l.b16 %v536
    %v641 = vunpack.c.l.b16 %v537
    %v642 = vunpack.c.l.b16 %v538
    %v643 = vunpack.c.l.b16 %v539
    %v644 = vpack.c.b16 %v597, %v596
    %v645 = vpack.c.b16 %v599, %v598
    %v646 = vpack.c.b16 %v601, %v600
    %v647 = vpack.c.b16 %v603, %v602
    %v648 = vpack.c.b16 %v605, %v604
    %v649 = vpack.c.b16 %v607, %v606
    %v650 = vpack.c.b16 %v609, %v608
    %v651 = vpack.c.b16 %v611, %v610
    %v652 = vpack.c.b16 %v613, %v612
    %v653 = vpack.c.b16 %v615, %v614
    %v654 = vpack.c.b16 %v617, %v616
    %v655 = vpack.c.b16 %v619, %v618
    %v656 = vpack.c.b16 %v621, %v620
    %v657 = vpack.c.b16 %v623, %v622
    %v658 = vpack.c.b16 %v625, %v624
    %v659 = vpack.c.b16 %v627, %v626
    %v660 = vpack.c.b16 %v629, %v628
    %v661 = vpack.c.b16 %v631, %v630
    %v662 = vpack.c.b16 %v633, %v632
    %v663 = vpack.c.b16 %v635, %v634
    %v664 = vpack.c.b16 %v637, %v636
    %v665 = vpack.c.b16 %v639, %v638
    %v666 = vpack.c.b16 %v641, %v640
    %v667 = vpack.c.b16 %v643, %v642
    %692 = vmatprep.subr.bf16.mxu0 0
    %693 = vmatpush1.bf16.msra.mxu0 %v644
    %694 = vmatprep.subr.bf16.mxu0 0
    %695 = vmatpush1.bf16.msra.mxu0 %v645
    %696 = vmatprep.subr.bf16.mxu0 0
    %697 = vmatpush1.bf16.msra.mxu0 %v646
    %698 = vmatprep.subr.bf16.mxu0 0
    %699 = vmatpush1.bf16.msra.mxu0 %v647
    %700 = vmatprep.subr.bf16.mxu0 0
    %701 = vmatpush1.bf16.msra.mxu0 %v648
    %702 = vmatprep.subr.bf16.mxu0 0
    %703 = vmatpush1.bf16.msra.mxu0 %v649
    %704 = vmatprep.subr.bf16.mxu0 0
    %705 = vmatpush1.bf16.msra.mxu0 %v650
    %706 = vmatprep.subr.bf16.mxu0 0
    %707 = vmatpush1.bf16.msra.mxu0 %v651
    %708 = vmatprep.subr.bf16.mxu0 0
    %709 = vmatpush1.bf16.msra.mxu0 %v652
    %710 = vmatprep.subr.bf16.mxu0 0
    %711 = vmatpush1.bf16.msra.mxu0 %v653
    %712 = vmatprep.subr.bf16.mxu0 0
    %713 = vmatpush1.bf16.msra.mxu0 %v654
    %714 = vmatprep.subr.bf16.mxu0 0
    %715 = vmatpush1.bf16.msra.mxu0 %v655
    %716 = vmatprep.subr.bf16.mxu0 0
    %717 = vmatpush1.bf16.msra.mxu0 %v656
    %718 = vmatprep.subr.bf16.mxu0 0
    %719 = vmatpush1.bf16.msra.mxu0 %v657
    %720 = vmatprep.subr.bf16.mxu0 0
    %721 = vmatpush1.bf16.msra.mxu0 %v658
    %722 = vmatprep.subr.bf16.mxu0 0
    %723 = vmatpush1.bf16.msra.mxu0 %v659
    %724 = vmatprep.mubr.bf16.mxu0 %v487
    %725 = vmatmul.mubr.bf16.gmra.mrb[0].mxu0 %v486
    %v726 = vpop.f32.mrb[0].mxu0
    %v727 = vadd.f32 %v546, %v726
    %v728 = vpop.f32.mrb[0].mxu0
    %v729 = vpop.f32.mrb[0].mxu0
    %v730 = vadd.f32 %v546, %v729
    %v731 = vpop.f32.mrb[0].mxu0
    %732 = vmatprep.mubr.bf16.mxu0 %v490
    %733 = vmatmul.mubr.bf16.gmra.mrb[0].mxu0 %v489
    %v734 = vpop.f32.mrb[0].mxu0
    %v735 = vadd.f32 %v546, %v734
    %v736 = vpop.f32.mrb[0].mxu0
    %v737 = vpop.f32.mrb[0].mxu0
    %v738 = vadd.f32 %v546, %v737
    %v739 = vpop.f32.mrb[0].mxu0
    %740 = vdwg.mxu0
    %741 = vmatprep.subr.bf16.mxu0 0
    %742 = vmatpush1.bf16.msra.mxu0 %v660
    %743 = vmatprep.subr.bf16.mxu0 0
    %744 = vmatpush1.bf16.msra.mxu0 %v661
    %745 = vmatprep.subr.bf16.mxu0 0
    %746 = vmatpush1.bf16.msra.mxu0 %v662
    %747 = vmatprep.subr.bf16.mxu0 0
    %748 = vmatpush1.bf16.msra.mxu0 %v663
    %749 = vmatprep.subr.bf16.mxu0 0
    %750 = vmatpush1.bf16.msra.mxu0 %v664
    %751 = vmatprep.subr.bf16.mxu0 0
    %752 = vmatpush1.bf16.msra.mxu0 %v665
    %753 = vmatprep.subr.bf16.mxu0 0
    %754 = vmatpush1.bf16.msra.mxu0 %v666
    %755 = vmatprep.subr.bf16.mxu0 0
    %756 = vmatpush1.bf16.msra.mxu0 %v667
    %757 = vmatprep.subr.bf16.mxu0 0
    %758 = vmatpush1.bf16.msra.mxu0 0
    %759 = vmatprep.subr.bf16.mxu0 0
    %760 = vmatpush1.bf16.msra.mxu0 0
    %761 = vmatprep.subr.bf16.mxu0 0
    %762 = vmatpush1.bf16.msra.mxu0 0
    %763 = vmatprep.subr.bf16.mxu0 0
    %764 = vmatpush1.bf16.msra.mxu0 0
    %765 = vmatprep.subr.bf16.mxu0 0
    %766 = vmatpush1.bf16.msra.mxu0 0
    %767 = vmatprep.subr.bf16.mxu0 0
    %768 = vmatpush1.bf16.msra.mxu0 0
    %769 = vmatprep.subr.bf16.mxu0 0
    %770 = vmatpush1.bf16.msra.mxu0 0
    %771 = vmatprep.subr.bf16.mxu0 0
    %772 = vmatpush1.bf16.msra.mxu0 0
    %773 = vmatprep.mubr.bf16.mxu0 0
    %774 = vmatmul.mubr.bf16.gmra.mrb[0].mxu0 %v488
    %v775 = vpop.f32.mrb[0].mxu0
    %v776 = vadd.f32 %v727, %v775
    %v777 = vpop.f32.mrb[0].mxu0
    %v778 = vpop.f32.mrb[0].mxu0
    %v779 = vadd.f32 %v730, %v778
    %v780 = vpop.f32.mrb[0].mxu0
    %781 = vmatprep.mubr.bf16.mxu0 0
    %782 = vmatmul.mubr.bf16.gmra.mrb[0].mxu0 %v491
    %v783 = vpop.f32.mrb[0].mxu0
    %v784 = vadd.f32 %v735, %v783
    %v785 = vpop.f32.mrb[0].mxu0
    %v786 = vpop.f32.mrb[0].mxu0
    %v787 = vadd.f32 %v738, %v786
    %v788 = vpop.f32.mrb[0].mxu0
    %789 = vdwg.mxu0
    %v790 = vld [vmem:[#allocation5 + $0x180] sm:$0xf]
    %v791 = vld [vmem:[#allocation5 + $0x184] sm:$0xf]
    %v792 = vld [vmem:[#allocation5 + $0x188] sm:$0xf]
    %v793 = vld [vmem:[#allocation5 + $0x18c] sm:$0xf]
    %v794 = vld [vmem:[#allocation5 + $0x190] sm:$0xf]
    %v795 = vld [vmem:[#allocation5 + $0x194] sm:$0xf]
    %v796 = vld [vmem:[#allocation5 + $0x198] sm:$0xf]
    %v797 = vld [vmem:[#allocation5 + $0x19c] sm:$0xf]
    %v798 = vld [vmem:[#allocation5 + $0x1a0] sm:$0xf]
    %v799 = vld [vmem:[#allocation5 + $0x1a4] sm:$0xf]
    %v800 = vld [vmem:[#allocation5 + $0x1a8] sm:$0xf]
    %v801 = vld [vmem:[#allocation5 + $0x1ac] sm:$0xf]
    %v802 = vld [vmem:[#allocation5 + $0x1b0] sm:$0xf]
    %v803 = vld [vmem:[#allocation5 + $0x1b4] sm:$0xf]
    %v804 = vld [vmem:[#allocation5 + $0x1b8] sm:$0xf]
    %v805 = vld [vmem:[#allocation5 + $0x1bc] sm:$0xf]
    %s806 = scalar_lea.vmem %s2, 2
    %v807 = vld [vmem:[%s806] sm:$0x1]
    %v809 = vlaneseq
    %v810 = vshrl.u32 %v809, 7
    %v811 = vsub.s32 0, %v810
    %v812 = vrot.slane %v807, %v811
    %v818 = vunpack.c.l.b16 %v97
    %v819 = vunpack.c.l.b16 %v98
    %v820 = vunpack.c.l.b16 %v99
    %v821 = vunpack.c.l.b16 %v100
    %v822 = vpack.c.b16 %v819, %v818
    %v823 = vpack.c.b16 %v821, %v820
    %v842 = vunpack.c.l.b16 %v790
    %v843 = vunpack.c.l.b16 %v791
    %v844 = vunpack.c.l.b16 %v792
    %v845 = vunpack.c.l.b16 %v793
    %v846 = vunpack.c.l.b16 %v794
    %v847 = vunpack.c.l.b16 %v795
    %v848 = vunpack.c.l.b16 %v796
    %v849 = vunpack.c.l.b16 %v797
    %v850 = vunpack.c.l.b16 %v798
    %v851 = vunpack.c.l.b16 %v799
    %v852 = vunpack.c.l.b16 %v800
    %v853 = vunpack.c.l.b16 %v801
    %v854 = vunpack.c.l.b16 %v802
    %v855 = vunpack.c.l.b16 %v803
    %v856 = vunpack.c.l.b16 %v804
    %v857 = vunpack.c.l.b16 %v805
    %v858 = vpack.c.b16 %v843, %v842
    %v859 = vpack.c.b16 %v845, %v844
    %v860 = vpack.c.b16 %v847, %v846
    %v861 = vpack.c.b16 %v849, %v848
    %v862 = vpack.c.b16 %v851, %v850
    %v863 = vpack.c.b16 %v853, %v852
    %v864 = vpack.c.b16 %v855, %v854
    %v865 = vpack.c.b16 %v857, %v856
    %874 = vmatprep.subr.bf16.mxu0 0
    %875 = vmatpush1.bf16.msra.mxu0 %v858
    %876 = vmatprep.subr.bf16.mxu0 0
    %877 = vmatpush1.bf16.msra.mxu0 %v859
    %878 = vmatprep.subr.bf16.mxu0 0
    %879 = vmatpush1.bf16.msra.mxu0 %v860
    %880 = vmatprep.subr.bf16.mxu0 0
    %881 = vmatpush1.bf16.msra.mxu0 %v861
    %882 = vmatprep.subr.bf16.mxu0 0
    %883 = vmatpush1.bf16.msra.mxu0 %v862
    %884 = vmatprep.subr.bf16.mxu0 0
    %885 = vmatpush1.bf16.msra.mxu0 %v863
    %886 = vmatprep.subr.bf16.mxu0 0
    %887 = vmatpush1.bf16.msra.mxu0 %v864
    %888 = vmatprep.subr.bf16.mxu0 0
    %889 = vmatpush1.bf16.msra.mxu0 %v865
    %890 = vmatprep.subr.bf16.mxu0 0
    %891 = vmatpush1.bf16.msra.mxu0 0
    %892 = vmatprep.subr.bf16.mxu0 0
    %893 = vmatpush1.bf16.msra.mxu0 0
    %894 = vmatprep.subr.bf16.mxu0 0
    %895 = vmatpush1.bf16.msra.mxu0 0
    %896 = vmatprep.subr.bf16.mxu0 0
    %897 = vmatpush1.bf16.msra.mxu0 0
    %898 = vmatprep.subr.bf16.mxu0 0
    %899 = vmatpush1.bf16.msra.mxu0 0
    %900 = vmatprep.subr.bf16.mxu0 0
    %901 = vmatpush1.bf16.msra.mxu0 0
    %902 = vmatprep.subr.bf16.mxu0 0
    %903 = vmatpush1.bf16.msra.mxu0 0
    %904 = vmatprep.subr.bf16.mxu0 0
    %905 = vmatpush1.bf16.msra.mxu0 0
    %906 = vmatprep.mubr.bf16.mxu0 0
    %907 = vmatmul.mubr.bf16.gmra.mrb[0].mxu0 %v822
    %v908 = vpop.f32.mrb[0].mxu0
    %v909 = vadd.f32 %v812, %v908
    %v910 = vpop.f32.mrb[0].mxu0
    %v911 = vpop.f32.mrb[0].mxu0
    %v912 = vadd.f32 %v812, %v911
    %v913 = vpop.f32.mrb[0].mxu0
    %914 = vmatprep.mubr.bf16.mxu0 0
    %915 = vmatmul.mubr.bf16.gmra.mrb[0].mxu0 %v823
    %v916 = vpop.f32.mrb[0].mxu0
    %v917 = vadd.f32 %v812, %v916
    %v918 = vpop.f32.mrb[0].mxu0
    %v919 = vpop.f32.mrb[0].mxu0
    %v920 = vadd.f32 %v812, %v919
    %v921 = vpop.f32.mrb[0].mxu0
    %922 = vdwg.mxu0
    %v923 = vadd.f32 %v776, %v909
    %v924 = vadd.f32 %v779, %v912
    %v925 = vadd.f32 %v784, %v917
    %v926 = vadd.f32 %v787, %v920
    %v927 = vmax.f32 %v923, 0.0
    %v928 = vmax.f32 %v924, 0.0
    %v929 = vmax.f32 %v925, 0.0
    %v930 = vmax.f32 %v926, 0.0
    %v931 = vrot.slane %v927, 4
    %v932 = vrot.slane %v928, 4
    %v933 = vrot.slane %v929, 4
    %v934 = vrot.slane %v930, 4
    %vm935 = vcmp.lt.s32.totalorder %v45, 4
    %v936 = vsel %vm935, %v933, %v934
    %v937 = vsel %vm935, %v932, %v933
    %v938 = vsel %vm935, %v931, %v932
    %v939 = vsel %vm935, %v934, %v931
    %vm940 = vcmp.ge.s32.totalorder %v93, 4
    %vm941 = vcmp.ge.s32.totalorder %v94, 4
    %vm942 = vcmp.ge.s32.totalorder %v95, 4
    %vm943 = vcmp.ge.s32.totalorder %v96, 4
    %v944 = vsel %vm940, 1, 0
    %v945 = vsel %vm941, 1, 0
    %v946 = vsel %vm942, 1, 0
    %v947 = vsel %vm943, 1, 0
    %vm948 = vcmp.eq.s32.totalorder %v944, 1
    %vm949 = vcmp.eq.s32.totalorder %v945, 1
    %vm950 = vcmp.eq.s32.totalorder %v946, 1
    %vm951 = vcmp.eq.s32.totalorder %v947, 1
    %v952 = vsel %vm948, %v939, 0.0
    %v953 = vsel %vm949, %v938, 0.0
    %v954 = vsel %vm950, %v937, 0.0
    %v955 = vsel %vm951, %v936, 0.0
    %v956 = vrot.slane %v927, 5
    %v957 = vrot.slane %v928, 5
    %v958 = vrot.slane %v929, 5
    %v959 = vrot.slane %v930, 5
    %vm960 = vcmp.lt.s32.totalorder %v45, 3
    %v961 = vsel %vm960, %v958, %v959
    %v962 = vsel %vm960, %v957, %v958
    %v963 = vsel %vm960, %v956, %v957
    %v964 = vsel %vm960, %v959, %v956
    %vm965 = vcmp.ge.s32.totalorder %v93, 3
    %vm966 = vcmp.ge.s32.totalorder %v94, 3
    %vm967 = vcmp.ge.s32.totalorder %v95, 3
    %vm968 = vcmp.ge.s32.totalorder %v96, 3
    %v969 = vsel %vm965, 1, 0
    %v970 = vsel %vm966, 1, 0
    %v971 = vsel %vm967, 1, 0
    %v972 = vsel %vm968, 1, 0
    %vm973 = vcmp.eq.s32.totalorder %v969, 1
    %vm974 = vcmp.eq.s32.totalorder %v970, 1
    %vm975 = vcmp.eq.s32.totalorder %v971, 1
    %vm976 = vcmp.eq.s32.totalorder %v972, 1
    %v977 = vsel %vm973, %v964, 0.0
    %v978 = vsel %vm974, %v963, 0.0
    %v979 = vsel %vm975, %v962, 0.0
    %v980 = vsel %vm976, %v961, 0.0
    %v981 = vrot.slane %v927, 3
    %v982 = vrot.slane %v928, 3
    %v983 = vrot.slane %v929, 3
    %v984 = vrot.slane %v930, 3
    %vm985 = vcmp.lt.s32.totalorder %v45, 5
    %v986 = vsel %vm985, %v983, %v984
    %v987 = vsel %vm985, %v982, %v983
    %v988 = vsel %vm985, %v981, %v982
    %v989 = vsel %vm985, %v984, %v981
    %vm990 = vcmp.lt.s32.totalorder %v93, 13
    %vm991 = vcmp.lt.s32.totalorder %v94, 13
    %vm992 = vcmp.lt.s32.totalorder %v95, 13
    %vm993 = vcmp.lt.s32.totalorder %v96, 13
    %v994 = vsel %vm990, 1, 0
    %v995 = vsel %vm991, 1, 0
    %v996 = vsel %vm992, 1, 0
    %v997 = vsel %vm993, 1, 0
    %vm998 = vcmp.eq.s32.totalorder %v994, 1
    %vm999 = vcmp.eq.s32.totalorder %v995, 1
    %vm1000 = vcmp.eq.s32.totalorder %v996, 1
    %vm1001 = vcmp.eq.s32.totalorder %v997, 1
    %v1002 = vsel %vm998, %v988, 0.0
    %v1003 = vsel %vm999, %v987, 0.0
    %v1004 = vsel %vm1000, %v986, 0.0
    %v1005 = vsel %vm1001, %v989, 0.0
    %vm1006 = vcmp.lt.s32.totalorder %v93, 12
    %vm1007 = vcmp.lt.s32.totalorder %v94, 12
    %vm1008 = vcmp.lt.s32.totalorder %v95, 12
    %vm1009 = vcmp.lt.s32.totalorder %v96, 12
    %v1010 = vsel %vm1006, 1, 0
    %v1011 = vsel %vm1007, 1, 0
    %v1012 = vsel %vm1008, 1, 0
    %v1013 = vsel %vm1009, 1, 0
    %vm1014 = vcmp.eq.s32.totalorder %v1010, 1
    %vm1015 = vcmp.eq.s32.totalorder %v1011, 1
    %vm1016 = vcmp.eq.s32.totalorder %v1012, 1
    %vm1017 = vcmp.eq.s32.totalorder %v1013, 1
    %v1018 = vsel %vm1014, %v938, 0.0
    %v1019 = vsel %vm1015, %v937, 0.0
    %v1020 = vsel %vm1016, %v936, 0.0
    %v1021 = vsel %vm1017, %v939, 0.0
    %v1022 = vpack.c.bf16 %v953, %v952
    %v1023 = vpack.c.bf16 %v978, %v977
    %v1024 = vpack.c.bf16 %v1003, %v1002
    %v1025 = vpack.c.bf16 %v1019, %v1018
    %v1026 = vpack.c.bf16 %v955, %v954
    %v1027 = vpack.c.bf16 %v980, %v979
    %v1028 = vpack.c.bf16 %v1005, %v1004
    %v1029 = vpack.c.bf16 %v1021, %v1020
    %v1030 = vld [vmem:[#allocation5 + $0x1c0] sm:$0xf]
    %v1031 = vld [vmem:[#allocation5 + $0x1c4] sm:$0xf]
    %v1032 = vld [vmem:[#allocation5 + $0x1c8] sm:$0xf]
    %v1033 = vld [vmem:[#allocation5 + $0x1cc] sm:$0xf]
    %v1034 = vld [vmem:[#allocation5 + $0x1d0] sm:$0xf]
    %v1035 = vld [vmem:[#allocation5 + $0x1d4] sm:$0xf]
    %v1036 = vld [vmem:[#allocation5 + $0x1d8] sm:$0xf]
    %v1037 = vld [vmem:[#allocation5 + $0x1dc] sm:$0xf]
    %v1038 = vld [vmem:[#allocation5 + $0x1e0] sm:$0xf]
    %v1039 = vld [vmem:[#allocation5 + $0x1e4] sm:$0xf]
    %v1040 = vld [vmem:[#allocation5 + $0x1e8] sm:$0xf]
    %v1041 = vld [vmem:[#allocation5 + $0x1ec] sm:$0xf]
    %v1042 = vld [vmem:[#allocation5 + $0x1f0] sm:$0xf]
    %v1043 = vld [vmem:[#allocation5 + $0x1f4] sm:$0xf]
    %v1044 = vld [vmem:[#allocation5 + $0x1f8] sm:$0xf]
    %v1045 = vld [vmem:[#allocation5 + $0x1fc] sm:$0xf]
    %v1046 = vld [vmem:[#allocation5 + $0x200] sm:$0xf]
    %v1047 = vld [vmem:[#allocation5 + $0x204] sm:$0xf]
    %v1048 = vld [vmem:[#allocation5 + $0x208] sm:$0xf]
    %v1049 = vld [vmem:[#allocation5 + $0x20c] sm:$0xf]
    %v1050 = vld [vmem:[#allocation5 + $0x210] sm:$0xf]
    %v1051 = vld [vmem:[#allocation5 + $0x214] sm:$0xf]
    %v1052 = vld [vmem:[#allocation5 + $0x218] sm:$0xf]
    %v1053 = vld [vmem:[#allocation5 + $0x21c] sm:$0xf]
    %v1054 = vld [vmem:[#allocation5 + $0x220] sm:$0xf]
    %v1055 = vld [vmem:[#allocation5 + $0x224] sm:$0xf]
    %v1056 = vld [vmem:[#allocation5 + $0x228] sm:$0xf]
    %v1057 = vld [vmem:[#allocation5 + $0x22c] sm:$0xf]
    %v1058 = vld [vmem:[#allocation5 + $0x230] sm:$0xf]
    %v1059 = vld [vmem:[#allocation5 + $0x234] sm:$0xf]
    %v1060 = vld [vmem:[#allocation5 + $0x238] sm:$0xf]
    %v1061 = vld [vmem:[#allocation5 + $0x23c] sm:$0xf]
    %v1062 = vld [vmem:[#allocation5 + $0x240] sm:$0xf]
    %v1063 = vld [vmem:[#allocation5 + $0x244] sm:$0xf]
    %v1064 = vld [vmem:[#allocation5 + $0x248] sm:$0xf]
    %v1065 = vld [vmem:[#allocation5 + $0x24c] sm:$0xf]
    %v1066 = vld [vmem:[#allocation5 + $0x250] sm:$0xf]
    %v1067 = vld [vmem:[#allocation5 + $0x254] sm:$0xf]
    %v1068 = vld [vmem:[#allocation5 + $0x258] sm:$0xf]
    %v1069 = vld [vmem:[#allocation5 + $0x25c] sm:$0xf]
    %v1070 = vld [vmem:[#allocation5 + $0x260] sm:$0xf]
    %v1071 = vld [vmem:[#allocation5 + $0x264] sm:$0xf]
    %v1072 = vld [vmem:[#allocation5 + $0x268] sm:$0xf]
    %v1073 = vld [vmem:[#allocation5 + $0x26c] sm:$0xf]
    %v1074 = vld [vmem:[#allocation5 + $0x270] sm:$0xf]
    %v1075 = vld [vmem:[#allocation5 + $0x274] sm:$0xf]
    %v1076 = vld [vmem:[#allocation5 + $0x278] sm:$0xf]
    %v1077 = vld [vmem:[#allocation5 + $0x27c] sm:$0xf]
    %v1078 = vld [vmem:[#allocation5 + $0x280] sm:$0xf]
    %v1079 = vld [vmem:[#allocation5 + $0x284] sm:$0xf]
    %v1080 = vld [vmem:[#allocation5 + $0x288] sm:$0xf]
    %v1081 = vld [vmem:[#allocation5 + $0x28c] sm:$0xf]
    %v1082 = vld [vmem:[#allocation5 + $0x290] sm:$0xf]
    %v1083 = vld [vmem:[#allocation5 + $0x294] sm:$0xf]
    %v1084 = vld [vmem:[#allocation5 + $0x298] sm:$0xf]
    %v1085 = vld [vmem:[#allocation5 + $0x29c] sm:$0xf]
    %v1086 = vld [vmem:[#allocation5 + $0x2a0] sm:$0xf]
    %v1087 = vld [vmem:[#allocation5 + $0x2a4] sm:$0xf]
    %v1088 = vld [vmem:[#allocation5 + $0x2a8] sm:$0xf]
    %v1089 = vld [vmem:[#allocation5 + $0x2ac] sm:$0xf]
    %v1090 = vld [vmem:[#allocation5 + $0x2b0] sm:$0xf]
    %v1091 = vld [vmem:[#allocation5 + $0x2b4] sm:$0xf]
    %v1092 = vld [vmem:[#allocation5 + $0x2b8] sm:$0xf]
    %v1093 = vld [vmem:[#allocation5 + $0x2bc] sm:$0xf]
    %s1094 = scalar_lea.vmem %s2, 3
    %v1095 = vld [vmem:[%s1094] sm:$0x1]
    %v1097 = vlaneseq
    %v1098 = vshrl.u32 %v1097, 7
    %v1099 = vsub.s32 0, %v1098
    %v1100 = vrot.slane %v1095, %v1099
    %v1166 = vunpack.c.l.b16 %v1030
    %v1167 = vunpack.c.l.b16 %v1031
    %v1168 = vunpack.c.l.b16 %v1032
    %v1169 = vunpack.c.l.b16 %v1033
    %v1170 = vunpack.c.l.b16 %v1034
    %v1171 = vunpack.c.l.b16 %v1035
    %v1172 = vunpack.c.l.b16 %v1036
    %v1173 = vunpack.c.l.b16 %v1037
    %v1174 = vunpack.c.l.b16 %v1038
    %v1175 = vunpack.c.l.b16 %v1039
    %v1176 = vunpack.c.l.b16 %v1040
    %v1177 = vunpack.c.l.b16 %v1041
    %v1178 = vunpack.c.l.b16 %v1042
    %v1179 = vunpack.c.l.b16 %v1043
    %v1180 = vunpack.c.l.b16 %v1044
    %v1181 = vunpack.c.l.b16 %v1045
    %v1182 = vunpack.c.l.b16 %v1046
    %v1183 = vunpack.c.l.b16 %v1047
    %v1184 = vunpack.c.l.b16 %v1048
    %v1185 = vunpack.c.l.b16 %v1049
    %v1186 = vunpack.c.l.b16 %v1050
    %v1187 = vunpack.c.l.b16 %v1051
    %v1188 = vunpack.c.l.b16 %v1052
    %v1189 = vunpack.c.l.b16 %v1053
    %v1190 = vunpack.c.l.b16 %v1054
    %v1191 = vunpack.c.l.b16 %v1055
    %v1192 = vunpack.c.l.b16 %v1056
    %v1193 = vunpack.c.l.b16 %v1057
    %v1194 = vunpack.c.l.b16 %v1058
    %v1195 = vunpack.c.l.b16 %v1059
    %v1196 = vunpack.c.l.b16 %v1060
    %v1197 = vunpack.c.l.b16 %v1061
    %v1198 = vunpack.c.l.b16 %v1062
    %v1199 = vunpack.c.l.b16 %v1063
    %v1200 = vunpack.c.l.b16 %v1064
    %v1201 = vunpack.c.l.b16 %v1065
    %v1202 = vunpack.c.l.b16 %v1066
    %v1203 = vunpack.c.l.b16 %v1067
    %v1204 = vunpack.c.l.b16 %v1068
    %v1205 = vunpack.c.l.b16 %v1069
    %v1206 = vunpack.c.l.b16 %v1070
    %v1207 = vunpack.c.l.b16 %v1071
    %v1208 = vunpack.c.l.b16 %v1072
    %v1209 = vunpack.c.l.b16 %v1073
    %v1210 = vunpack.c.l.b16 %v1074
    %v1211 = vunpack.c.l.b16 %v1075
    %v1212 = vunpack.c.l.b16 %v1076
    %v1213 = vunpack.c.l.b16 %v1077
    %v1214 = vunpack.c.l.b16 %v1078
    %v1215 = vunpack.c.l.b16 %v1079
    %v1216 = vunpack.c.l.b16 %v1080
    %v1217 = vunpack.c.l.b16 %v1081
    %v1218 = vunpack.c.l.b16 %v1082
    %v1219 = vunpack.c.l.b16 %v1083
    %v1220 = vunpack.c.l.b16 %v1084
    %v1221 = vunpack.c.l.b16 %v1085
    %v1222 = vunpack.c.l.b16 %v1086
    %v1223 = vunpack.c.l.b16 %v1087
    %v1224 = vunpack.c.l.b16 %v1088
    %v1225 = vunpack.c.l.b16 %v1089
    %v1226 = vunpack.c.l.b16 %v1090
    %v1227 = vunpack.c.l.b16 %v1091
    %v1228 = vunpack.c.l.b16 %v1092
    %v1229 = vunpack.c.l.b16 %v1093
    %v1230 = vpack.c.b16 %v1167, %v1166
    %v1231 = vpack.c.b16 %v1169, %v1168
    %v1232 = vpack.c.b16 %v1171, %v1170
    %v1233 = vpack.c.b16 %v1173, %v1172
    %v1234 = vpack.c.b16 %v1175, %v1174
    %v1235 = vpack.c.b16 %v1177, %v1176
    %v1236 = vpack.c.b16 %v1179, %v1178
    %v1237 = vpack.c.b16 %v1181, %v1180
    %v1238 = vpack.c.b16 %v1183, %v1182
    %v1239 = vpack.c.b16 %v1185, %v1184
    %v1240 = vpack.c.b16 %v1187, %v1186
    %v1241 = vpack.c.b16 %v1189, %v1188
    %v1242 = vpack.c.b16 %v1191, %v1190
    %v1243 = vpack.c.b16 %v1193, %v1192
    %v1244 = vpack.c.b16 %v1195, %v1194
    %v1245 = vpack.c.b16 %v1197, %v1196
    %v1246 = vpack.c.b16 %v1199, %v1198
    %v1247 = vpack.c.b16 %v1201, %v1200
    %v1248 = vpack.c.b16 %v1203, %v1202
    %v1249 = vpack.c.b16 %v1205, %v1204
    %v1250 = vpack.c.b16 %v1207, %v1206
    %v1251 = vpack.c.b16 %v1209, %v1208
    %v1252 = vpack.c.b16 %v1211, %v1210
    %v1253 = vpack.c.b16 %v1213, %v1212
    %v1254 = vpack.c.b16 %v1215, %v1214
    %v1255 = vpack.c.b16 %v1217, %v1216
    %v1256 = vpack.c.b16 %v1219, %v1218
    %v1257 = vpack.c.b16 %v1221, %v1220
    %v1258 = vpack.c.b16 %v1223, %v1222
    %v1259 = vpack.c.b16 %v1225, %v1224
    %v1260 = vpack.c.b16 %v1227, %v1226
    %v1261 = vpack.c.b16 %v1229, %v1228
    %1294 = vmatprep.subr.bf16.mxu0 0
    %1295 = vmatpush1.bf16.msra.mxu0 %v1230
    %1296 = vmatprep.subr.bf16.mxu0 0
    %1297 = vmatpush1.bf16.msra.mxu0 %v1231
    %1298 = vmatprep.subr.bf16.mxu0 0
    %1299 = vmatpush1.bf16.msra.mxu0 %v1232
    %1300 = vmatprep.subr.bf16.mxu0 0
    %1301 = vmatpush1.bf16.msra.mxu0 %v1233
    %1302 = vmatprep.subr.bf16.mxu0 0
    %1303 = vmatpush1.bf16.msra.mxu0 %v1234
    %1304 = vmatprep.subr.bf16.mxu0 0
    %1305 = vmatpush1.bf16.msra.mxu0 %v1235
    %1306 = vmatprep.subr.bf16.mxu0 0
    %1307 = vmatpush1.bf16.msra.mxu0 %v1236
    %1308 = vmatprep.subr.bf16.mxu0 0
    %1309 = vmatpush1.bf16.msra.mxu0 %v1237
    %1310 = vmatprep.subr.bf16.mxu0 0
    %1311 = vmatpush1.bf16.msra.mxu0 %v1238
    %1312 = vmatprep.subr.bf16.mxu0 0
    %1313 = vmatpush1.bf16.msra.mxu0 %v1239
    %1314 = vmatprep.subr.bf16.mxu0 0
    %1315 = vmatpush1.bf16.msra.mxu0 %v1240
    %1316 = vmatprep.subr.bf16.mxu0 0
    %1317 = vmatpush1.bf16.msra.mxu0 %v1241
    %1318 = vmatprep.subr.bf16.mxu0 0
    %1319 = vmatpush1.bf16.msra.mxu0 %v1242
    %1320 = vmatprep.subr.bf16.mxu0 0
    %1321 = vmatpush1.bf16.msra.mxu0 %v1243
    %1322 = vmatprep.subr.bf16.mxu0 0
    %1323 = vmatpush1.bf16.msra.mxu0 %v1244
    %1324 = vmatprep.subr.bf16.mxu0 0
    %1325 = vmatpush1.bf16.msra.mxu0 %v1245
    %1326 = vmatprep.mubr.bf16.mxu0 %v1023
    %1327 = vmatmul.mubr.bf16.gmra.mrb[0].mxu0 %v1022
    %v1328 = vpop.f32.mrb[0].mxu0
    %v1329 = vadd.f32 %v1100, %v1328
    %v1330 = vpop.f32.mrb[0].mxu0
    %v1331 = vpop.f32.mrb[0].mxu0
    %v1332 = vadd.f32 %v1100, %v1331
    %v1333 = vpop.f32.mrb[0].mxu0
    %1334 = vmatprep.mubr.bf16.mxu0 %v1027
    %1335 = vmatmul.mubr.bf16.gmra.mrb[0].mxu0 %v1026
    %v1336 = vpop.f32.mrb[0].mxu0
    %v1337 = vadd.f32 %v1100, %v1336
    %v1338 = vpop.f32.mrb[0].mxu0
    %v1339 = vpop.f32.mrb[0].mxu0
    %v1340 = vadd.f32 %v1100, %v1339
    %v1341 = vpop.f32.mrb[0].mxu0
    %1342 = vdwg.mxu0
    %1343 = vmatprep.subr.bf16.mxu0 0
    %1344 = vmatpush1.bf16.msra.mxu0 %v1246
    %1345 = vmatprep.subr.bf16.mxu0 0
    %1346 = vmatpush1.bf16.msra.mxu0 %v1247
    %1347 = vmatprep.subr.bf16.mxu0 0
    %1348 = vmatpush1.bf16.msra.mxu0 %v1248
    %1349 = vmatprep.subr.bf16.mxu0 0
    %1350 = vmatpush1.bf16.msra.mxu0 %v1249
    %1351 = vmatprep.subr.bf16.mxu0 0
    %1352 = vmatpush1.bf16.msra.mxu0 %v1250
    %1353 = vmatprep.subr.bf16.mxu0 0
    %1354 = vmatpush1.bf16.msra.mxu0 %v1251
    %1355 = vmatprep.subr.bf16.mxu0 0
    %1356 = vmatpush1.bf16.msra.mxu0 %v1252
    %1357 = vmatprep.subr.bf16.mxu0 0
    %1358 = vmatpush1.bf16.msra.mxu0 %v1253
    %1359 = vmatprep.subr.bf16.mxu0 0
    %1360 = vmatpush1.bf16.msra.mxu0 %v1254
    %1361 = vmatprep.subr.bf16.mxu0 0
    %1362 = vmatpush1.bf16.msra.mxu0 %v1255
    %1363 = vmatprep.subr.bf16.mxu0 0
    %1364 = vmatpush1.bf16.msra.mxu0 %v1256
    %1365 = vmatprep.subr.bf16.mxu0 0
    %1366 = vmatpush1.bf16.msra.mxu0 %v1257
    %1367 = vmatprep.subr.bf16.mxu0 0
    %1368 = vmatpush1.bf16.msra.mxu0 %v1258
    %1369 = vmatprep.subr.bf16.mxu0 0
    %1370 = vmatpush1.bf16.msra.mxu0 %v1259
    %1371 = vmatprep.subr.bf16.mxu0 0
    %1372 = vmatpush1.bf16.msra.mxu0 %v1260
    %1373 = vmatprep.subr.bf16.mxu0 0
    %1374 = vmatpush1.bf16.msra.mxu0 %v1261
    %1375 = vmatprep.mubr.bf16.mxu0 %v1025
    %1376 = vmatmul.mubr.bf16.gmra.mrb[0].mxu0 %v1024
    %v1377 = vpop.f32.mrb[0].mxu0
    %v1378 = vadd.f32 %v1329, %v1377
    %v1379 = vpop.f32.mrb[0].mxu0
    %v1380 = vpop.f32.mrb[0].mxu0
    %v1381 = vadd.f32 %v1332, %v1380
    %v1382 = vpop.f32.mrb[0].mxu0
    %1383 = vmatprep.mubr.bf16.mxu0 %v1029
    %1384 = vmatmul.mubr.bf16.gmra.mrb[0].mxu0 %v1028
    %v1385 = vpop.f32.mrb[0].mxu0
    %v1386 = vadd.f32 %v1337, %v1385
    %v1387 = vpop.f32.mrb[0].mxu0
    %v1388 = vpop.f32.mrb[0].mxu0
    %v1389 = vadd.f32 %v1340, %v1388
    %v1390 = vpop.f32.mrb[0].mxu0
    %1391 = vdwg.mxu0
    %v1392 = vmax.f32 %v1378, 0.0
    %v1393 = vmax.f32 %v1381, 0.0
    %v1394 = vmax.f32 %v1386, 0.0
    %v1395 = vmax.f32 %v1389, 0.0
    %v1396 = vadd.f32 %v1392, 0.0
    %v1397 = vadd.f32 %v1393, 0.0
    %v1398 = vadd.f32 %v1394, 0.0
    %v1399 = vadd.f32 %v1395, 0.0
    %v1400 = vrot.slane %v927, 7
    %v1401 = vrot.slane %v928, 7
    %v1402 = vrot.slane %v929, 7
    %v1403 = vrot.slane %v930, 7
    %v1404 = vsel %vm109, %v1402, %v1403
    %v1405 = vsel %vm109, %v1401, %v1402
    %v1406 = vsel %vm109, %v1400, %v1401
    %v1407 = vsel %vm109, %v1403, %v1400
    %v1408 = vsel %vm122, %v1407, 0.0
    %v1409 = vsel %vm123, %v1406, 0.0
    %v1410 = vsel %vm124, %v1405, 0.0
    %v1411 = vsel %vm125, %v1404, 0.0
    %v1412 = vrot.slane %v927, 1
    %v1413 = vrot.slane %v928, 1
    %v1414 = vrot.slane %v929, 1
    %v1415 = vrot.slane %v930, 1
    %v1416 = vsel %vm134, %v1414, %v1415
    %v1417 = vsel %vm134, %v1413, %v1414
    %v1418 = vsel %vm134, %v1412, %v1413
    %v1419 = vsel %vm134, %v1415, %v1412
    %v1420 = vsel %vm147, %v1418, 0.0
    %v1421 = vsel %vm148, %v1417, 0.0
    %v1422 = vsel %vm149, %v1416, 0.0
    %v1423 = vsel %vm150, %v1419, 0.0
    %v1424 = vpack.c.bf16 %v1409, %v1408
    %v1425 = vpack.c.bf16 %v928, %v927
    %v1426 = vpack.c.bf16 %v1421, %v1420
    %v1427 = vpack.c.bf16 %v1411, %v1410
    %v1428 = vpack.c.bf16 %v930, %v929
    %v1429 = vpack.c.bf16 %v1423, %v1422
    %v1430 = vld [vmem:[#allocation5 + $0x2c0] sm:$0xf]
    %v1431 = vld [vmem:[#allocation5 + $0x2c4] sm:$0xf]
    %v1432 = vld [vmem:[#allocation5 + $0x2c8] sm:$0xf]
    %v1433 = vld [vmem:[#allocation5 + $0x2cc] sm:$0xf]
    %v1434 = vld [vmem:[#allocation5 + $0x2d0] sm:$0xf]
    %v1435 = vld [vmem:[#allocation5 + $0x2d4] sm:$0xf]
    %v1436 = vld [vmem:[#allocation5 + $0x2d8] sm:$0xf]
    %v1437 = vld [vmem:[#allocation5 + $0x2dc] sm:$0xf]
    %v1438 = vld [vmem:[#allocation5 + $0x2e0] sm:$0xf]
    %v1439 = vld [vmem:[#allocation5 + $0x2e4] sm:$0xf]
    %v1440 = vld [vmem:[#allocation5 + $0x2e8] sm:$0xf]
    %v1441 = vld [vmem:[#allocation5 + $0x2ec] sm:$0xf]
    %v1442 = vld [vmem:[#allocation5 + $0x2f0] sm:$0xf]
    %v1443 = vld [vmem:[#allocation5 + $0x2f4] sm:$0xf]
    %v1444 = vld [vmem:[#allocation5 + $0x2f8] sm:$0xf]
    %v1445 = vld [vmem:[#allocation5 + $0x2fc] sm:$0xf]
    %v1446 = vld [vmem:[#allocation5 + $0x300] sm:$0xf]
    %v1447 = vld [vmem:[#allocation5 + $0x304] sm:$0xf]
    %v1448 = vld [vmem:[#allocation5 + $0x308] sm:$0xf]
    %v1449 = vld [vmem:[#allocation5 + $0x30c] sm:$0xf]
    %v1450 = vld [vmem:[#allocation5 + $0x310] sm:$0xf]
    %v1451 = vld [vmem:[#allocation5 + $0x314] sm:$0xf]
    %v1452 = vld [vmem:[#allocation5 + $0x318] sm:$0xf]
    %v1453 = vld [vmem:[#allocation5 + $0x31c] sm:$0xf]
    %v1454 = vld [vmem:[#allocation5 + $0x320] sm:$0xf]
    %v1455 = vld [vmem:[#allocation5 + $0x324] sm:$0xf]
    %v1456 = vld [vmem:[#allocation5 + $0x328] sm:$0xf]
    %v1457 = vld [vmem:[#allocation5 + $0x32c] sm:$0xf]
    %v1458 = vld [vmem:[#allocation5 + $0x330] sm:$0xf]
    %v1459 = vld [vmem:[#allocation5 + $0x334] sm:$0xf]
    %v1460 = vld [vmem:[#allocation5 + $0x338] sm:$0xf]
    %v1461 = vld [vmem:[#allocation5 + $0x33c] sm:$0xf]
    %v1462 = vld [vmem:[#allocation5 + $0x340] sm:$0xf]
    %v1463 = vld [vmem:[#allocation5 + $0x344] sm:$0xf]
    %v1464 = vld [vmem:[#allocation5 + $0x348] sm:$0xf]
    %v1465 = vld [vmem:[#allocation5 + $0x34c] sm:$0xf]
    %v1466 = vld [vmem:[#allocation5 + $0x350] sm:$0xf]
    %v1467 = vld [vmem:[#allocation5 + $0x354] sm:$0xf]
    %v1468 = vld [vmem:[#allocation5 + $0x358] sm:$0xf]
    %v1469 = vld [vmem:[#allocation5 + $0x35c] sm:$0xf]
    %v1470 = vld [vmem:[#allocation5 + $0x360] sm:$0xf]
    %v1471 = vld [vmem:[#allocation5 + $0x364] sm:$0xf]
    %v1472 = vld [vmem:[#allocation5 + $0x368] sm:$0xf]
    %v1473 = vld [vmem:[#allocation5 + $0x36c] sm:$0xf]
    %v1474 = vld [vmem:[#allocation5 + $0x370] sm:$0xf]
    %v1475 = vld [vmem:[#allocation5 + $0x374] sm:$0xf]
    %v1476 = vld [vmem:[#allocation5 + $0x378] sm:$0xf]
    %v1477 = vld [vmem:[#allocation5 + $0x37c] sm:$0xf]
    %s1478 = scalar_lea.vmem %s2, 4
    %v1479 = vld [vmem:[%s1478] sm:$0x1]
    %v1481 = vlaneseq
    %v1482 = vshrl.u32 %v1481, 7
    %v1483 = vsub.s32 0, %v1482
    %v1484 = vrot.slane %v1479, %v1483
    %v1534 = vunpack.c.l.b16 %v1430
    %v1535 = vunpack.c.l.b16 %v1431
    %v1536 = vunpack.c.l.b16 %v1432
    %v1537 = vunpack.c.l.b16 %v1433
    %v1538 = vunpack.c.l.b16 %v1434
    %v1539 = vunpack.c.l.b16 %v1435
    %v1540 = vunpack.c.l.b16 %v1436
    %v1541 = vunpack.c.l.b16 %v1437
    %v1542 = vunpack.c.l.b16 %v1438
    %v1543 = vunpack.c.l.b16 %v1439
    %v1544 = vunpack.c.l.b16 %v1440
    %v1545 = vunpack.c.l.b16 %v1441
    %v1546 = vunpack.c.l.b16 %v1442
    %v1547 = vunpack.c.l.b16 %v1443
    %v1548 = vunpack.c.l.b16 %v1444
    %v1549 = vunpack.c.l.b16 %v1445
    %v1550 = vunpack.c.l.b16 %v1446
    %v1551 = vunpack.c.l.b16 %v1447
    %v1552 = vunpack.c.l.b16 %v1448
    %v1553 = vunpack.c.l.b16 %v1449
    %v1554 = vunpack.c.l.b16 %v1450
    %v1555 = vunpack.c.l.b16 %v1451
    %v1556 = vunpack.c.l.b16 %v1452
    %v1557 = vunpack.c.l.b16 %v1453
    %v1558 = vunpack.c.l.b16 %v1454
    %v1559 = vunpack.c.l.b16 %v1455
    %v1560 = vunpack.c.l.b16 %v1456
    %v1561 = vunpack.c.l.b16 %v1457
    %v1562 = vunpack.c.l.b16 %v1458
    %v1563 = vunpack.c.l.b16 %v1459
    %v1564 = vunpack.c.l.b16 %v1460
    %v1565 = vunpack.c.l.b16 %v1461
    %v1566 = vunpack.c.l.b16 %v1462
    %v1567 = vunpack.c.l.b16 %v1463
    %v1568 = vunpack.c.l.b16 %v1464
    %v1569 = vunpack.c.l.b16 %v1465
    %v1570 = vunpack.c.l.b16 %v1466
    %v1571 = vunpack.c.l.b16 %v1467
    %v1572 = vunpack.c.l.b16 %v1468
    %v1573 = vunpack.c.l.b16 %v1469
    %v1574 = vunpack.c.l.b16 %v1470
    %v1575 = vunpack.c.l.b16 %v1471
    %v1576 = vunpack.c.l.b16 %v1472
    %v1577 = vunpack.c.l.b16 %v1473
    %v1578 = vunpack.c.l.b16 %v1474
    %v1579 = vunpack.c.l.b16 %v1475
    %v1580 = vunpack.c.l.b16 %v1476
    %v1581 = vunpack.c.l.b16 %v1477
    %v1582 = vpack.c.b16 %v1535, %v1534
    %v1583 = vpack.c.b16 %v1537, %v1536
    %v1584 = vpack.c.b16 %v1539, %v1538
    %v1585 = vpack.c.b16 %v1541, %v1540
    %v1586 = vpack.c.b16 %v1543, %v1542
    %v1587 = vpack.c.b16 %v1545, %v1544
    %v1588 = vpack.c.b16 %v1547, %v1546
    %v1589 = vpack.c.b16 %v1549, %v1548
    %v1590 = vpack.c.b16 %v1551, %v1550
    %v1591 = vpack.c.b16 %v1553, %v1552
    %v1592 = vpack.c.b16 %v1555, %v1554
    %v1593 = vpack.c.b16 %v1557, %v1556
    %v1594 = vpack.c.b16 %v1559, %v1558
    %v1595 = vpack.c.b16 %v1561, %v1560
    %v1596 = vpack.c.b16 %v1563, %v1562
    %v1597 = vpack.c.b16 %v1565, %v1564
    %v1598 = vpack.c.b16 %v1567, %v1566
    %v1599 = vpack.c.b16 %v1569, %v1568
    %v1600 = vpack.c.b16 %v1571, %v1570
    %v1601 = vpack.c.b16 %v1573, %v1572
    %v1602 = vpack.c.b16 %v1575, %v1574
    %v1603 = vpack.c.b16 %v1577, %v1576
    %v1604 = vpack.c.b16 %v1579, %v1578
    %v1605 = vpack.c.b16 %v1581, %v1580
    %1630 = vmatprep.subr.bf16.mxu0 0
    %1631 = vmatpush1.bf16.msra.mxu0 %v1582
    %1632 = vmatprep.subr.bf16.mxu0 0
    %1633 = vmatpush1.bf16.msra.mxu0 %v1583
    %1634 = vmatprep.subr.bf16.mxu0 0
    %1635 = vmatpush1.bf16.msra.mxu0 %v1584
    %1636 = vmatprep.subr.bf16.mxu0 0
    %1637 = vmatpush1.bf16.msra.mxu0 %v1585
    %1638 = vmatprep.subr.bf16.mxu0 0
    %1639 = vmatpush1.bf16.msra.mxu0 %v1586
    %1640 = vmatprep.subr.bf16.mxu0 0
    %1641 = vmatpush1.bf16.msra.mxu0 %v1587
    %1642 = vmatprep.subr.bf16.mxu0 0
    %1643 = vmatpush1.bf16.msra.mxu0 %v1588
    %1644 = vmatprep.subr.bf16.mxu0 0
    %1645 = vmatpush1.bf16.msra.mxu0 %v1589
    %1646 = vmatprep.subr.bf16.mxu0 0
    %1647 = vmatpush1.bf16.msra.mxu0 %v1590
    %1648 = vmatprep.subr.bf16.mxu0 0
    %1649 = vmatpush1.bf16.msra.mxu0 %v1591
    %1650 = vmatprep.subr.bf16.mxu0 0
    %1651 = vmatpush1.bf16.msra.mxu0 %v1592
    %1652 = vmatprep.subr.bf16.mxu0 0
    %1653 = vmatpush1.bf16.msra.mxu0 %v1593
    %1654 = vmatprep.subr.bf16.mxu0 0
    %1655 = vmatpush1.bf16.msra.mxu0 %v1594
    %1656 = vmatprep.subr.bf16.mxu0 0
    %1657 = vmatpush1.bf16.msra.mxu0 %v1595
    %1658 = vmatprep.subr.bf16.mxu0 0
    %1659 = vmatpush1.bf16.msra.mxu0 %v1596
    %1660 = vmatprep.subr.bf16.mxu0 0
    %1661 = vmatpush1.bf16.msra.mxu0 %v1597
    %1662 = vmatprep.mubr.bf16.mxu0 %v1425
    %1663 = vmatmul.mubr.bf16.gmra.mrb[0].mxu0 %v1424
    %v1664 = vpop.f32.mrb[0].mxu0
    %v1665 = vadd.f32 %v1484, %v1664
    %v1666 = vpop.f32.mrb[0].mxu0
    %v1667 = vpop.f32.mrb[0].mxu0
    %v1668 = vadd.f32 %v1484, %v1667
    %v1669 = vpop.f32.mrb[0].mxu0
    %1670 = vmatprep.mubr.bf16.mxu0 %v1428
    %1671 = vmatmul.mubr.bf16.gmra.mrb[0].mxu0 %v1427
    %v1672 = vpop.f32.mrb[0].mxu0
    %v1673 = vadd.f32 %v1484, %v1672
    %v1674 = vpop.f32.mrb[0].mxu0
    %v1675 = vpop.f32.mrb[0].mxu0
    %v1676 = vadd.f32 %v1484, %v1675
    %v1677 = vpop.f32.mrb[0].mxu0
    %1678 = vdwg.mxu0
    %1679 = vmatprep.subr.bf16.mxu0 0
    %1680 = vmatpush1.bf16.msra.mxu0 %v1598
    %1681 = vmatprep.subr.bf16.mxu0 0
    %1682 = vmatpush1.bf16.msra.mxu0 %v1599
    %1683 = vmatprep.subr.bf16.mxu0 0
    %1684 = vmatpush1.bf16.msra.mxu0 %v1600
    %1685 = vmatprep.subr.bf16.mxu0 0
    %1686 = vmatpush1.bf16.msra.mxu0 %v1601
    %1687 = vmatprep.subr.bf16.mxu0 0
    %1688 = vmatpush1.bf16.msra.mxu0 %v1602
    %1689 = vmatprep.subr.bf16.mxu0 0
    %1690 = vmatpush1.bf16.msra.mxu0 %v1603
    %1691 = vmatprep.subr.bf16.mxu0 0
    %1692 = vmatpush1.bf16.msra.mxu0 %v1604
    %1693 = vmatprep.subr.bf16.mxu0 0
    %1694 = vmatpush1.bf16.msra.mxu0 %v1605
    %1695 = vmatprep.subr.bf16.mxu0 0
    %1696 = vmatpush1.bf16.msra.mxu0 0
    %1697 = vmatprep.subr.bf16.mxu0 0
    %1698 = vmatpush1.bf16.msra.mxu0 0
    %1699 = vmatprep.subr.bf16.mxu0 0
    %1700 = vmatpush1.bf16.msra.mxu0 0
    %1701 = vmatprep.subr.bf16.mxu0 0
    %1702 = vmatpush1.bf16.msra.mxu0 0
    %1703 = vmatprep.subr.bf16.mxu0 0
    %1704 = vmatpush1.bf16.msra.mxu0 0
    %1705 = vmatprep.subr.bf16.mxu0 0
    %1706 = vmatpush1.bf16.msra.mxu0 0
    %1707 = vmatprep.subr.bf16.mxu0 0
    %1708 = vmatpush1.bf16.msra.mxu0 0
    %1709 = vmatprep.subr.bf16.mxu0 0
    %1710 = vmatpush1.bf16.msra.mxu0 0
    %1711 = vmatprep.mubr.bf16.mxu0 0
    %1712 = vmatmul.mubr.bf16.gmra.mrb[0].mxu0 %v1426
    %v1713 = vpop.f32.mrb[0].mxu0
    %v1714 = vadd.f32 %v1665, %v1713
    %v1715 = vpop.f32.mrb[0].mxu0
    %v1716 = vpop.f32.mrb[0].mxu0
    %v1717 = vadd.f32 %v1668, %v1716
    %v1718 = vpop.f32.mrb[0].mxu0
    %1719 = vmatprep.mubr.bf16.mxu0 0
    %1720 = vmatmul.mubr.bf16.gmra.mrb[0].mxu0 %v1429
    %v1721 = vpop.f32.mrb[0].mxu0
    %v1722 = vadd.f32 %v1673, %v1721
    %v1723 = vpop.f32.mrb[0].mxu0
    %v1724 = vpop.f32.mrb[0].mxu0
    %v1725 = vadd.f32 %v1676, %v1724
    %v1726 = vpop.f32.mrb[0].mxu0
    %1727 = vdwg.mxu0
    %v1728 = vmax.f32 %v1714, 0.0
    %v1729 = vmax.f32 %v1717, 0.0
    %v1730 = vmax.f32 %v1722, 0.0
    %v1731 = vmax.f32 %v1725, 0.0
    %v1732 = vrot.slane %v1728, 7
    %v1733 = vrot.slane %v1729, 7
    %v1734 = vrot.slane %v1730, 7
    %v1735 = vrot.slane %v1731, 7
    %v1736 = vsel %vm109, %v1734, %v1735
    %v1737 = vsel %vm109, %v1733, %v1734
    %v1738 = vsel %vm109, %v1732, %v1733
    %v1739 = vsel %vm109, %v1735, %v1732
    %v1740 = vsel %vm122, %v1739, 0.0
    %v1741 = vsel %vm123, %v1738, 0.0
    %v1742 = vsel %vm124, %v1737, 0.0
    %v1743 = vsel %vm125, %v1736, 0.0
    %v1744 = vrot.slane %v1728, 1
    %v1745 = vrot.slane %v1729, 1
    %v1746 = vrot.slane %v1730, 1
    %v1747 = vrot.slane %v1731, 1
    %v1748 = vsel %vm134, %v1746, %v1747
    %v1749 = vsel %vm134, %v1745, %v1746
    %v1750 = vsel %vm134, %v1744, %v1745
    %v1751 = vsel %vm134, %v1747, %v1744
    %v1752 = vsel %vm147, %v1750, 0.0
    %v1753 = vsel %vm148, %v1749, 0.0
    %v1754 = vsel %vm149, %v1748, 0.0
    %v1755 = vsel %vm150, %v1751, 0.0
    %v1756 = vpack.c.bf16 %v1741, %v1740
    %v1757 = vpack.c.bf16 %v1729, %v1728
    %v1758 = vpack.c.bf16 %v1753, %v1752
    %v1759 = vpack.c.bf16 %v1743, %v1742
    %v1760 = vpack.c.bf16 %v1731, %v1730
    %v1761 = vpack.c.bf16 %v1755, %v1754
    %v1762 = vld [vmem:[#allocation5 + $0x380] sm:$0xf]
    %v1763 = vld [vmem:[#allocation5 + $0x384] sm:$0xf]
    %v1764 = vld [vmem:[#allocation5 + $0x388] sm:$0xf]
    %v1765 = vld [vmem:[#allocation5 + $0x38c] sm:$0xf]
    %v1766 = vld [vmem:[#allocation5 + $0x390] sm:$0xf]
    %v1767 = vld [vmem:[#allocation5 + $0x394] sm:$0xf]
    %v1768 = vld [vmem:[#allocation5 + $0x398] sm:$0xf]
    %v1769 = vld [vmem:[#allocation5 + $0x39c] sm:$0xf]
    %v1770 = vld [vmem:[#allocation5 + $0x3a0] sm:$0xf]
    %v1771 = vld [vmem:[#allocation5 + $0x3a4] sm:$0xf]
    %v1772 = vld [vmem:[#allocation5 + $0x3a8] sm:$0xf]
    %v1773 = vld [vmem:[#allocation5 + $0x3ac] sm:$0xf]
    %v1774 = vld [vmem:[#allocation5 + $0x3b0] sm:$0xf]
    %v1775 = vld [vmem:[#allocation5 + $0x3b4] sm:$0xf]
    %v1776 = vld [vmem:[#allocation5 + $0x3b8] sm:$0xf]
    %v1777 = vld [vmem:[#allocation5 + $0x3bc] sm:$0xf]
    %v1778 = vld [vmem:[#allocation5 + $0x3c0] sm:$0xf]
    %v1779 = vld [vmem:[#allocation5 + $0x3c4] sm:$0xf]
    %v1780 = vld [vmem:[#allocation5 + $0x3c8] sm:$0xf]
    %v1781 = vld [vmem:[#allocation5 + $0x3cc] sm:$0xf]
    %v1782 = vld [vmem:[#allocation5 + $0x3d0] sm:$0xf]
    %v1783 = vld [vmem:[#allocation5 + $0x3d4] sm:$0xf]
    %v1784 = vld [vmem:[#allocation5 + $0x3d8] sm:$0xf]
    %v1785 = vld [vmem:[#allocation5 + $0x3dc] sm:$0xf]
    %v1786 = vld [vmem:[#allocation5 + $0x3e0] sm:$0xf]
    %v1787 = vld [vmem:[#allocation5 + $0x3e4] sm:$0xf]
    %v1788 = vld [vmem:[#allocation5 + $0x3e8] sm:$0xf]
    %v1789 = vld [vmem:[#allocation5 + $0x3ec] sm:$0xf]
    %v1790 = vld [vmem:[#allocation5 + $0x3f0] sm:$0xf]
    %v1791 = vld [vmem:[#allocation5 + $0x3f4] sm:$0xf]
    %v1792 = vld [vmem:[#allocation5 + $0x3f8] sm:$0xf]
    %v1793 = vld [vmem:[#allocation5 + $0x3fc] sm:$0xf]
    %v1794 = vld [vmem:[#allocation5 + $0x400] sm:$0xf]
    %v1795 = vld [vmem:[#allocation5 + $0x404] sm:$0xf]
    %v1796 = vld [vmem:[#allocation5 + $0x408] sm:$0xf]
    %v1797 = vld [vmem:[#allocation5 + $0x40c] sm:$0xf]
    %v1798 = vld [vmem:[#allocation5 + $0x410] sm:$0xf]
    %v1799 = vld [vmem:[#allocation5 + $0x414] sm:$0xf]
    %v1800 = vld [vmem:[#allocation5 + $0x418] sm:$0xf]
    %v1801 = vld [vmem:[#allocation5 + $0x41c] sm:$0xf]
    %v1802 = vld [vmem:[#allocation5 + $0x420] sm:$0xf]
    %v1803 = vld [vmem:[#allocation5 + $0x424] sm:$0xf]
    %v1804 = vld [vmem:[#allocation5 + $0x428] sm:$0xf]
    %v1805 = vld [vmem:[#allocation5 + $0x42c] sm:$0xf]
    %v1806 = vld [vmem:[#allocation5 + $0x430] sm:$0xf]
    %v1807 = vld [vmem:[#allocation5 + $0x434] sm:$0xf]
    %v1808 = vld [vmem:[#allocation5 + $0x438] sm:$0xf]
    %v1809 = vld [vmem:[#allocation5 + $0x43c] sm:$0xf]
    %s1810 = scalar_lea.vmem %s2, 5
    %v1811 = vld [vmem:[%s1810] sm:$0x1]
    %v1813 = vlaneseq
    %v1814 = vshrl.u32 %v1813, 7
    %v1815 = vsub.s32 0, %v1814
    %v1816 = vrot.slane %v1811, %v1815
    %v1866 = vunpack.c.l.b16 %v1762
    %v1867 = vunpack.c.l.b16 %v1763
    %v1868 = vunpack.c.l.b16 %v1764
    %v1869 = vunpack.c.l.b16 %v1765
    %v1870 = vunpack.c.l.b16 %v1766
    %v1871 = vunpack.c.l.b16 %v1767
    %v1872 = vunpack.c.l.b16 %v1768
    %v1873 = vunpack.c.l.b16 %v1769
    %v1874 = vunpack.c.l.b16 %v1770
    %v1875 = vunpack.c.l.b16 %v1771
    %v1876 = vunpack.c.l.b16 %v1772
    %v1877 = vunpack.c.l.b16 %v1773
    %v1878 = vunpack.c.l.b16 %v1774
    %v1879 = vunpack.c.l.b16 %v1775
    %v1880 = vunpack.c.l.b16 %v1776
    %v1881 = vunpack.c.l.b16 %v1777
    %v1882 = vunpack.c.l.b16 %v1778
    %v1883 = vunpack.c.l.b16 %v1779
    %v1884 = vunpack.c.l.b16 %v1780
    %v1885 = vunpack.c.l.b16 %v1781
    %v1886 = vunpack.c.l.b16 %v1782
    %v1887 = vunpack.c.l.b16 %v1783
    %v1888 = vunpack.c.l.b16 %v1784
    %v1889 = vunpack.c.l.b16 %v1785
    %v1890 = vunpack.c.l.b16 %v1786
    %v1891 = vunpack.c.l.b16 %v1787
    %v1892 = vunpack.c.l.b16 %v1788
    %v1893 = vunpack.c.l.b16 %v1789
    %v1894 = vunpack.c.l.b16 %v1790
    %v1895 = vunpack.c.l.b16 %v1791
    %v1896 = vunpack.c.l.b16 %v1792
    %v1897 = vunpack.c.l.b16 %v1793
    %v1898 = vunpack.c.l.b16 %v1794
    %v1899 = vunpack.c.l.b16 %v1795
    %v1900 = vunpack.c.l.b16 %v1796
    %v1901 = vunpack.c.l.b16 %v1797
    %v1902 = vunpack.c.l.b16 %v1798
    %v1903 = vunpack.c.l.b16 %v1799
    %v1904 = vunpack.c.l.b16 %v1800
    %v1905 = vunpack.c.l.b16 %v1801
    %v1906 = vunpack.c.l.b16 %v1802
    %v1907 = vunpack.c.l.b16 %v1803
    %v1908 = vunpack.c.l.b16 %v1804
    %v1909 = vunpack.c.l.b16 %v1805
    %v1910 = vunpack.c.l.b16 %v1806
    %v1911 = vunpack.c.l.b16 %v1807
    %v1912 = vunpack.c.l.b16 %v1808
    %v1913 = vunpack.c.l.b16 %v1809
    %v1914 = vpack.c.b16 %v1867, %v1866
    %v1915 = vpack.c.b16 %v1869, %v1868
    %v1916 = vpack.c.b16 %v1871, %v1870
    %v1917 = vpack.c.b16 %v1873, %v1872
    %v1918 = vpack.c.b16 %v1875, %v1874
    %v1919 = vpack.c.b16 %v1877, %v1876
    %v1920 = vpack.c.b16 %v1879, %v1878
    %v1921 = vpack.c.b16 %v1881, %v1880
    %v1922 = vpack.c.b16 %v1883, %v1882
    %v1923 = vpack.c.b16 %v1885, %v1884
    %v1924 = vpack.c.b16 %v1887, %v1886
    %v1925 = vpack.c.b16 %v1889, %v1888
    %v1926 = vpack.c.b16 %v1891, %v1890
    %v1927 = vpack.c.b16 %v1893, %v1892
    %v1928 = vpack.c.b16 %v1895, %v1894
    %v1929 = vpack.c.b16 %v1897, %v1896
    %v1930 = vpack.c.b16 %v1899, %v1898
    %v1931 = vpack.c.b16 %v1901, %v1900
    %v1932 = vpack.c.b16 %v1903, %v1902
    %v1933 = vpack.c.b16 %v1905, %v1904
    %v1934 = vpack.c.b16 %v1907, %v1906
    %v1935 = vpack.c.b16 %v1909, %v1908
    %v1936 = vpack.c.b16 %v1911, %v1910
    %v1937 = vpack.c.b16 %v1913, %v1912
    %1962 = vmatprep.subr.bf16.mxu0 0
    %1963 = vmatpush1.bf16.msra.mxu0 %v1914
    %1964 = vmatprep.subr.bf16.mxu0 0
    %1965 = vmatpush1.bf16.msra.mxu0 %v1915
    %1966 = vmatprep.subr.bf16.mxu0 0
    %1967 = vmatpush1.bf16.msra.mxu0 %v1916
    %1968 = vmatprep.subr.bf16.mxu0 0
    %1969 = vmatpush1.bf16.msra.mxu0 %v1917
    %1970 = vmatprep.subr.bf16.mxu0 0
    %1971 = vmatpush1.bf16.msra.mxu0 %v1918
    %1972 = vmatprep.subr.bf16.mxu0 0
    %1973 = vmatpush1.bf16.msra.mxu0 %v1919
    %1974 = vmatprep.subr.bf16.mxu0 0
    %1975 = vmatpush1.bf16.msra.mxu0 %v1920
    %1976 = vmatprep.subr.bf16.mxu0 0
    %1977 = vmatpush1.bf16.msra.mxu0 %v1921
    %1978 = vmatprep.subr.bf16.mxu0 0
    %1979 = vmatpush1.bf16.msra.mxu0 %v1922
    %1980 = vmatprep.subr.bf16.mxu0 0
    %1981 = vmatpush1.bf16.msra.mxu0 %v1923
    %1982 = vmatprep.subr.bf16.mxu0 0
    %1983 = vmatpush1.bf16.msra.mxu0 %v1924
    %1984 = vmatprep.subr.bf16.mxu0 0
    %1985 = vmatpush1.bf16.msra.mxu0 %v1925
    %1986 = vmatprep.subr.bf16.mxu0 0
    %1987 = vmatpush1.bf16.msra.mxu0 %v1926
    %1988 = vmatprep.subr.bf16.mxu0 0
    %1989 = vmatpush1.bf16.msra.mxu0 %v1927
    %1990 = vmatprep.subr.bf16.mxu0 0
    %1991 = vmatpush1.bf16.msra.mxu0 %v1928
    %1992 = vmatprep.subr.bf16.mxu0 0
    %1993 = vmatpush1.bf16.msra.mxu0 %v1929
    %1994 = vmatprep.mubr.bf16.mxu0 %v1757
    %1995 = vmatmul.mubr.bf16.gmra.mrb[0].mxu0 %v1756
    %v1996 = vpop.f32.mrb[0].mxu0
    %v1997 = vadd.f32 %v1816, %v1996
    %v1998 = vpop.f32.mrb[0].mxu0
    %v1999 = vpop.f32.mrb[0].mxu0
    %v2000 = vadd.f32 %v1816, %v1999
    %v2001 = vpop.f32.mrb[0].mxu0
    %2002 = vmatprep.mubr.bf16.mxu0 %v1760
    %2003 = vmatmul.mubr.bf16.gmra.mrb[0].mxu0 %v1759
    %v2004 = vpop.f32.mrb[0].mxu0
    %v2005 = vadd.f32 %v1816, %v2004
    %v2006 = vpop.f32.mrb[0].mxu0
    %v2007 = vpop.f32.mrb[0].mxu0
    %v2008 = vadd.f32 %v1816, %v2007
    %v2009 = vpop.f32.mrb[0].mxu0
    %2010 = vdwg.mxu0
    %2011 = vmatprep.subr.bf16.mxu0 0
    %2012 = vmatpush1.bf16.msra.mxu0 %v1930
    %2013 = vmatprep.subr.bf16.mxu0 0
    %2014 = vmatpush1.bf16.msra.mxu0 %v1931
    %2015 = vmatprep.subr.bf16.mxu0 0
    %2016 = vmatpush1.bf16.msra.mxu0 %v1932
    %2017 = vmatprep.subr.bf16.mxu0 0
    %2018 = vmatpush1.bf16.msra.mxu0 %v1933
    %2019 = vmatprep.subr.bf16.mxu0 0
    %2020 = vmatpush1.bf16.msra.mxu0 %v1934
    %2021 = vmatprep.subr.bf16.mxu0 0
    %2022 = vmatpush1.bf16.msra.mxu0 %v1935
    %2023 = vmatprep.subr.bf16.mxu0 0
    %2024 = vmatpush1.bf16.msra.mxu0 %v1936
    %2025 = vmatprep.subr.bf16.mxu0 0
    %2026 = vmatpush1.bf16.msra.mxu0 %v1937
    %2027 = vmatprep.subr.bf16.mxu0 0
    %2028 = vmatpush1.bf16.msra.mxu0 0
    %2029 = vmatprep.subr.bf16.mxu0 0
    %2030 = vmatpush1.bf16.msra.mxu0 0
    %2031 = vmatprep.subr.bf16.mxu0 0
    %2032 = vmatpush1.bf16.msra.mxu0 0
    %2033 = vmatprep.subr.bf16.mxu0 0
    %2034 = vmatpush1.bf16.msra.mxu0 0
    %2035 = vmatprep.subr.bf16.mxu0 0
    %2036 = vmatpush1.bf16.msra.mxu0 0
    %2037 = vmatprep.subr.bf16.mxu0 0
    %2038 = vmatpush1.bf16.msra.mxu0 0
    %2039 = vmatprep.subr.bf16.mxu0 0
    %2040 = vmatpush1.bf16.msra.mxu0 0
    %2041 = vmatprep.subr.bf16.mxu0 0
    %2042 = vmatpush1.bf16.msra.mxu0 0
    %2043 = vmatprep.mubr.bf16.mxu0 0
    %2044 = vmatmul.mubr.bf16.gmra.mrb[0].mxu0 %v1758
    %v2045 = vpop.f32.mrb[0].mxu0
    %v2046 = vadd.f32 %v1997, %v2045
    %v2047 = vpop.f32.mrb[0].mxu0
    %v2048 = vpop.f32.mrb[0].mxu0
    %v2049 = vadd.f32 %v2000, %v2048
    %v2050 = vpop.f32.mrb[0].mxu0
    %2051 = vmatprep.mubr.bf16.mxu0 0
    %2052 = vmatmul.mubr.bf16.gmra.mrb[0].mxu0 %v1761
    %v2053 = vpop.f32.mrb[0].mxu0
    %v2054 = vadd.f32 %v2005, %v2053
    %v2055 = vpop.f32.mrb[0].mxu0
    %v2056 = vpop.f32.mrb[0].mxu0
    %v2057 = vadd.f32 %v2008, %v2056
    %v2058 = vpop.f32.mrb[0].mxu0
    %2059 = vdwg.mxu0
    %v2060 = vadd.f32 %v2046, %v927
    %v2061 = vadd.f32 %v2049, %v928
    %v2062 = vadd.f32 %v2054, %v929
    %v2063 = vadd.f32 %v2057, %v930
    %v2064 = vmax.f32 %v2060, 0.0
    %v2065 = vmax.f32 %v2061, 0.0
    %v2066 = vmax.f32 %v2062, 0.0
    %v2067 = vmax.f32 %v2063, 0.0
    %v2068 = vrot.slane %v2064, 4
    %v2069 = vrot.slane %v2065, 4
    %v2070 = vrot.slane %v2066, 4
    %v2071 = vrot.slane %v2067, 4
    %v2072 = vsel %vm935, %v2070, %v2071
    %v2073 = vsel %vm935, %v2069, %v2070
    %v2074 = vsel %vm935, %v2068, %v2069
    %v2075 = vsel %vm935, %v2071, %v2068
    %v2076 = vsel %vm948, %v2075, 0.0
    %v2077 = vsel %vm949, %v2074, 0.0
    %v2078 = vsel %vm950, %v2073, 0.0
    %v2079 = vsel %vm951, %v2072, 0.0
    %v2080 = vsel %vm1014, %v2074, 0.0
    %v2081 = vsel %vm1015, %v2073, 0.0
    %v2082 = vsel %vm1016, %v2072, 0.0
    %v2083 = vsel %vm1017, %v2075, 0.0
    %v2084 = vpack.c.bf16 %v2077, %v2076
    %v2085 = vpack.c.bf16 %v2081, %v2080
    %v2086 = vpack.c.bf16 %v2079, %v2078
    %v2087 = vpack.c.bf16 %v2083, %v2082
    %v2088 = vld [vmem:[#allocation5 + $0x440] sm:$0xf]
    %v2089 = vld [vmem:[#allocation5 + $0x444] sm:$0xf]
    %v2090 = vld [vmem:[#allocation5 + $0x448] sm:$0xf]
    %v2091 = vld [vmem:[#allocation5 + $0x44c] sm:$0xf]
    %v2092 = vld [vmem:[#allocation5 + $0x450] sm:$0xf]
    %v2093 = vld [vmem:[#allocation5 + $0x454] sm:$0xf]
    %v2094 = vld [vmem:[#allocation5 + $0x458] sm:$0xf]
    %v2095 = vld [vmem:[#allocation5 + $0x45c] sm:$0xf]
    %v2096 = vld [vmem:[#allocation5 + $0x460] sm:$0xf]
    %v2097 = vld [vmem:[#allocation5 + $0x464] sm:$0xf]
    %v2098 = vld [vmem:[#allocation5 + $0x468] sm:$0xf]
    %v2099 = vld [vmem:[#allocation5 + $0x46c] sm:$0xf]
    %v2100 = vld [vmem:[#allocation5 + $0x470] sm:$0xf]
    %v2101 = vld [vmem:[#allocation5 + $0x474] sm:$0xf]
    %v2102 = vld [vmem:[#allocation5 + $0x478] sm:$0xf]
    %v2103 = vld [vmem:[#allocation5 + $0x47c] sm:$0xf]
    %v2104 = vld [vmem:[#allocation5 + $0x480] sm:$0xf]
    %v2105 = vld [vmem:[#allocation5 + $0x484] sm:$0xf]
    %v2106 = vld [vmem:[#allocation5 + $0x488] sm:$0xf]
    %v2107 = vld [vmem:[#allocation5 + $0x48c] sm:$0xf]
    %v2108 = vld [vmem:[#allocation5 + $0x490] sm:$0xf]
    %v2109 = vld [vmem:[#allocation5 + $0x494] sm:$0xf]
    %v2110 = vld [vmem:[#allocation5 + $0x498] sm:$0xf]
    %v2111 = vld [vmem:[#allocation5 + $0x49c] sm:$0xf]
    %v2112 = vld [vmem:[#allocation5 + $0x4a0] sm:$0xf]
    %v2113 = vld [vmem:[#allocation5 + $0x4a4] sm:$0xf]
    %v2114 = vld [vmem:[#allocation5 + $0x4a8] sm:$0xf]
    %v2115 = vld [vmem:[#allocation5 + $0x4ac] sm:$0xf]
    %v2116 = vld [vmem:[#allocation5 + $0x4b0] sm:$0xf]
    %v2117 = vld [vmem:[#allocation5 + $0x4b4] sm:$0xf]
    %v2118 = vld [vmem:[#allocation5 + $0x4b8] sm:$0xf]
    %v2119 = vld [vmem:[#allocation5 + $0x4bc] sm:$0xf]
    %s2120 = scalar_lea.vmem %s2, 6
    %v2121 = vld [vmem:[%s2120] sm:$0x1]
    %v2123 = vlaneseq
    %v2124 = vshrl.u32 %v2123, 7
    %v2125 = vsub.s32 0, %v2124
    %v2126 = vrot.slane %v2121, %v2125
    %v2160 = vunpack.c.l.b16 %v2088
    %v2161 = vunpack.c.l.b16 %v2089
    %v2162 = vunpack.c.l.b16 %v2090
    %v2163 = vunpack.c.l.b16 %v2091
    %v2164 = vunpack.c.l.b16 %v2092
    %v2165 = vunpack.c.l.b16 %v2093
    %v2166 = vunpack.c.l.b16 %v2094
    %v2167 = vunpack.c.l.b16 %v2095
    %v2168 = vunpack.c.l.b16 %v2096
    %v2169 = vunpack.c.l.b16 %v2097
    %v2170 = vunpack.c.l.b16 %v2098
    %v2171 = vunpack.c.l.b16 %v2099
    %v2172 = vunpack.c.l.b16 %v2100
    %v2173 = vunpack.c.l.b16 %v2101
    %v2174 = vunpack.c.l.b16 %v2102
    %v2175 = vunpack.c.l.b16 %v2103
    %v2176 = vunpack.c.l.b16 %v2104
    %v2177 = vunpack.c.l.b16 %v2105
    %v2178 = vunpack.c.l.b16 %v2106
    %v2179 = vunpack.c.l.b16 %v2107
    %v2180 = vunpack.c.l.b16 %v2108
    %v2181 = vunpack.c.l.b16 %v2109
    %v2182 = vunpack.c.l.b16 %v2110
    %v2183 = vunpack.c.l.b16 %v2111
    %v2184 = vunpack.c.l.b16 %v2112
    %v2185 = vunpack.c.l.b16 %v2113
    %v2186 = vunpack.c.l.b16 %v2114
    %v2187 = vunpack.c.l.b16 %v2115
    %v2188 = vunpack.c.l.b16 %v2116
    %v2189 = vunpack.c.l.b16 %v2117
    %v2190 = vunpack.c.l.b16 %v2118
    %v2191 = vunpack.c.l.b16 %v2119
    %v2192 = vpack.c.b16 %v2161, %v2160
    %v2193 = vpack.c.b16 %v2163, %v2162
    %v2194 = vpack.c.b16 %v2165, %v2164
    %v2195 = vpack.c.b16 %v2167, %v2166
    %v2196 = vpack.c.b16 %v2169, %v2168
    %v2197 = vpack.c.b16 %v2171, %v2170
    %v2198 = vpack.c.b16 %v2173, %v2172
    %v2199 = vpack.c.b16 %v2175, %v2174
    %v2200 = vpack.c.b16 %v2177, %v2176
    %v2201 = vpack.c.b16 %v2179, %v2178
    %v2202 = vpack.c.b16 %v2181, %v2180
    %v2203 = vpack.c.b16 %v2183, %v2182
    %v2204 = vpack.c.b16 %v2185, %v2184
    %v2205 = vpack.c.b16 %v2187, %v2186
    %v2206 = vpack.c.b16 %v2189, %v2188
    %v2207 = vpack.c.b16 %v2191, %v2190
    %2224 = vmatprep.subr.bf16.mxu0 0
    %2225 = vmatpush1.bf16.msra.mxu0 %v2192
    %2226 = vmatprep.subr.bf16.mxu0 0
    %2227 = vmatpush1.bf16.msra.mxu0 %v2193
    %2228 = vmatprep.subr.bf16.mxu0 0
    %2229 = vmatpush1.bf16.msra.mxu0 %v2194
    %2230 = vmatprep.subr.bf16.mxu0 0
    %2231 = vmatpush1.bf16.msra.mxu0 %v2195
    %2232 = vmatprep.subr.bf16.mxu0 0
    %2233 = vmatpush1.bf16.msra.mxu0 %v2196
    %2234 = vmatprep.subr.bf16.mxu0 0
    %2235 = vmatpush1.bf16.msra.mxu0 %v2197
    %2236 = vmatprep.subr.bf16.mxu0 0
    %2237 = vmatpush1.bf16.msra.mxu0 %v2198
    %2238 = vmatprep.subr.bf16.mxu0 0
    %2239 = vmatpush1.bf16.msra.mxu0 %v2199
    %2240 = vmatprep.subr.bf16.mxu0 0
    %2241 = vmatpush1.bf16.msra.mxu0 %v2200
    %2242 = vmatprep.subr.bf16.mxu0 0
    %2243 = vmatpush1.bf16.msra.mxu0 %v2201
    %2244 = vmatprep.subr.bf16.mxu0 0
    %2245 = vmatpush1.bf16.msra.mxu0 %v2202
    %2246 = vmatprep.subr.bf16.mxu0 0
    %2247 = vmatpush1.bf16.msra.mxu0 %v2203
    %2248 = vmatprep.subr.bf16.mxu0 0
    %2249 = vmatpush1.bf16.msra.mxu0 %v2204
    %2250 = vmatprep.subr.bf16.mxu0 0
    %2251 = vmatpush1.bf16.msra.mxu0 %v2205
    %2252 = vmatprep.subr.bf16.mxu0 0
    %2253 = vmatpush1.bf16.msra.mxu0 %v2206
    %2254 = vmatprep.subr.bf16.mxu0 0
    %2255 = vmatpush1.bf16.msra.mxu0 %v2207
    %2256 = vmatprep.mubr.bf16.mxu0 %v2085
    %2257 = vmatmul.mubr.bf16.gmra.mrb[0].mxu0 %v2084
    %v2258 = vpop.f32.mrb[0].mxu0
    %v2259 = vadd.f32 %v2126, %v2258
    %v2260 = vpop.f32.mrb[0].mxu0
    %v2261 = vpop.f32.mrb[0].mxu0
    %v2262 = vadd.f32 %v2126, %v2261
    %v2263 = vpop.f32.mrb[0].mxu0
    %2264 = vmatprep.mubr.bf16.mxu0 %v2087
    %2265 = vmatmul.mubr.bf16.gmra.mrb[0].mxu0 %v2086
    %v2266 = vpop.f32.mrb[0].mxu0
    %v2267 = vadd.f32 %v2126, %v2266
    %v2268 = vpop.f32.mrb[0].mxu0
    %v2269 = vpop.f32.mrb[0].mxu0
    %v2270 = vadd.f32 %v2126, %v2269
    %v2271 = vpop.f32.mrb[0].mxu0
    %2272 = vdwg.mxu0
    %v2273 = vmax.f32 %v2259, 0.0
    %v2274 = vmax.f32 %v2262, 0.0
    %v2275 = vmax.f32 %v2267, 0.0
    %v2276 = vmax.f32 %v2270, 0.0
    %v2277 = vadd.f32 %v1396, %v2273
    %v2278 = vadd.f32 %v1397, %v2274
    %v2279 = vadd.f32 %v1398, %v2275
    %v2280 = vadd.f32 %v1399, %v2276
    %2281 = vst [vmem:[#allocation7] sm:$0xff] %v2277
    %2282 = vst [vmem:[#allocation7 + $0x8] sm:$0xff] %v2278
    %2283 = vst [vmem:[#allocation7 + $0x10] sm:$0xff] %v2279
    %2284 = vst [vmem:[#allocation7 + $0x18] sm:$0xff] %v2280
    // Predicated region
    $region22: #{tpu_custom_call.1} parent=1 // pred_check
      _
    $region23: #{tpu_custom_call.1} parent=1 // pred_check_branch
      %2286 = sbr.rel (0) target = $region25
    $region24: #{tpu_custom_call.1} parent=1 // pred_region
      %s2288 = ssub.s32 512, 512
      %2289 = vsyncadd [#allocation4], %s2288
      %s2290 = sshll.u32 [#allocation7], 4
      %s2291 = int_to_ptr.vmem [resolvable:$true] %s2290
      %2296 = dma.vmem_to_hbm [thread:$0]  %s2291, 512, %s3, [#allocation4], 128, 128, 8
    $region25: #{tpu_custom_call.1} parent=1 // pred_fallthru
      _
    // Predicated region
    $region26: #{tpu_custom_call.1} parent=1 // pred_check
      _
    $region27: #{tpu_custom_call.1} parent=1 // pred_check_branch
      %2298 = sbr.rel (0) target = $region29
    $region28: #{tpu_custom_call.1} parent=1 // pred_region
      %2299 = dma.done [#allocation4], 512
    $region29: #{tpu_custom_call.1} parent=1 // pred_fallthru
      _
    %2300 = vsyncpa [#allocation3], 1
    %2301 = vsyncpa [#allocation6], 1
    %2302 = vsyncpa [#allocation4], 1

</llo_original>
